<compile_context>
chip_gen: v5e
topology: v5e:2x2
jax: 0.10.0
libtpu: 0.0.40
codegen_flags: <defaults>
</compile_context>

<pallas_src>
import functools

import jax
import jax.numpy as jnp
from jax.experimental import pallas as pl
from jax.experimental.pallas import tpu as pltpu


def _self_attention_kernel(x_ref, wqkv_ref, wprojt_ref, params_ref, o_ref,
                           qkv_ref, acc_ref, *, num_heads, head_dim_p, eps):
    # x_ref:      (1, C, N)        channel-major tokens (N = H*W on the lane axis)
    # wqkv_ref:   (3*C_p, C)       head-padded qkv weight, scale folded into Q rows
    # wprojt_ref: (C_p, C)         head-padded, transposed proj weight
    # params_ref: (3, C, 1)        [proj bias, LN gamma, LN beta]
    # o_ref:      (1, C, N)
    # qkv_ref:    (3*C_p, N) f32   VMEM scratch (projected q/k/v, channel-major)
    # acc_ref:    (C, N)     f32   VMEM scratch (residual + bias + proj accumulator)
    x_cn = x_ref[0]                                    # (C, N) f32
    C, N = x_cn.shape
    C_p = num_heads * head_dim_p

    # Fused qkv projection, channel-major & head-padded (attention scale is
    # already folded into the Q rows of the weight).
    qkv_ref[...] = jnp.dot(wqkv_ref[...], x_cn,
                           preferred_element_type=jnp.float32)

    # Accumulator starts at residual + proj bias; per-head projected outputs are
    # accumulated on top, so attn_out is never materialized / concatenated.
    acc_ref[...] = x_cn + params_ref[0]

    def head_body(h, carry):
        off_q = pl.multiple_of(h * head_dim_p, 8)
        off_k = pl.multiple_of(C_p + h * head_dim_p, 8)
        off_v = pl.multiple_of(2 * C_p + h * head_dim_p, 8)

        q_h = qkv_ref[pl.ds(off_q, head_dim_p), :]             # (hd_p, N)
        k_h = qkv_ref[pl.ds(off_k, head_dim_p), :]             # (hd_p, N)
        v_h = qkv_ref[pl.ds(off_v, head_dim_p), :]             # (hd_p, N)

        # scores[i, j] = sum_d q[d, i] * k[d, j]   (no Q transpose needed)
        scores = jax.lax.dot_general(
            q_h, k_h, dimension_numbers=(((0,), (0,)), ((), ())),
            preferred_element_type=jnp.float32)                # (N, N)

        # Numerically-stable softmax; divide replaced by reciprocal + multiply.
        scores = scores - jnp.max(scores, axis=-1, keepdims=True)
        p = jnp.exp(scores)
        attn = p * (1.0 / jnp.sum(p, axis=-1, keepdims=True))  # (N, N)

        # out_h[d, i] = sum_j v[d, j] * attn[i, j]  (stays channel-major)
        out_h = jax.lax.dot_general(
            v_h, attn, dimension_numbers=(((1,), (1,)), ((), ())),
            preferred_element_type=jnp.float32)                # (hd_p, N)

        # Fused per-head output projection accumulation (padded rows are zero in
        # both out_h and the padded proj weight, so they contribute nothing).
        w_h = wprojt_ref[pl.ds(off_q, head_dim_p), :]          # (hd_p, C)
        acc_ref[...] += jax.lax.dot_general(
            w_h, out_h, dimension_numbers=(((0,), (0,)), ((), ())),
            preferred_element_type=jnp.float32)                # (C, N)
        return carry

    # Real (non-unrolled) loop over heads: one (N, N) matrix live at a time.
    jax.lax.fori_loop(0, num_heads, head_body, 0)

    # Residual is already in acc; LayerNorm over the channel (sublane) axis.
    z = acc_ref[...]
    mean = jnp.mean(z, axis=0, keepdims=True)                  # (1, N)
    var = jnp.mean((z - mean) ** 2, axis=0, keepdims=True)     # (1, N)
    normed = (z - mean) * jax.lax.rsqrt(var + eps)
    o_ref[0] = normed * params_ref[1] + params_ref[2]


def self_attention(x, w_qkv, w_proj, b_proj, gamma, beta, *, num_heads=8,
                   eps=1e-5):
    """x: (B, C, H, W); weights in PyTorch Linear/LayerNorm layout. Returns (B, C, H, W)."""
    B, C, H, W = x.shape
    N = H * W
    assert C % num_heads == 0
    hd = C // num_heads
    scale = float(hd) ** -0.5
    hd_p = ((hd + 7) // 8) * 8          # pad each head to a sublane-aligned size
    C_p = num_heads * hd_p

    # ---- wrapper-side weight prep (one-time; cacheable alongside the params) ----
    # qkv weight -> (3, nh, hd, C); fold the attention scale into Q; zero-pad head dim.
    w3 = w_qkv.astype(jnp.float32).reshape(3, num_heads, hd, C)
    w3 = w3.at[0].multiply(scale)
    w3p = jnp.zeros((3, num_heads, hd_p, C), jnp.float32).at[:, :, :hd, :].set(w3)
    w_qkv_p = w3p.reshape(3 * C_p, C)

    # proj weight -> transposed + head-padded: row (h*hd_p + d) holds w_proj[:, h*hd + d].
    wp = w_proj.astype(jnp.float32).T.reshape(num_heads, hd, C)
    wpp = jnp.zeros((num_heads, hd_p, C), jnp.float32).at[:, :hd, :].set(wp)
    w_proj_t_p = wpp.reshape(C_p, C)

    # proj bias / LN gamma / LN beta fused into a single small parameter block.
    params = jnp.stack([
        b_proj.astype(jnp.float32).reshape(C, 1),
        gamma.astype(jnp.float32).reshape(C, 1),
        beta.astype(jnp.float32).reshape(C, 1),
    ])                                                          # (3, C, 1)

    x_flat = x.astype(jnp.float32).reshape(B, C, N)             # lane-dense tokens

    kernel = functools.partial(_self_attention_kernel, num_heads=num_heads,
                               head_dim_p=hd_p, eps=eps)

    # TODO(synk): for much larger H*W (N >~ 2-3K on v7x's 64 MiB VMEM) the full
    # (N, N) per-head matrix should be replaced by a KV-tiled online-softmax loop,
    # and for large B on single-TC chips (v5e/v6e) multiple batch elements could be
    # folded into one grid step; at B=2 we keep 2 grid steps so both v7x TCs are fed.
    out_flat = pl.pallas_call(
        kernel,
        out_shape=jax.ShapeDtypeStruct((B, C, N), jnp.float32),
        grid_spec=pltpu.PrefetchScalarGridSpec(
            num_scalar_prefetch=0,
            grid=(B,),
            in_specs=[
                pl.BlockSpec((1, C, N), lambda b: (b, 0, 0)),
                pl.BlockSpec((3 * C_p, C), lambda b: (0, 0)),
                pl.BlockSpec((C_p, C), lambda b: (0, 0)),
                pl.BlockSpec((3, C, 1), lambda b: (0, 0, 0)),
            ],
            out_specs=pl.BlockSpec((1, C, N), lambda b: (b, 0, 0)),
            scratch_shapes=[
                pltpu.VMEM((3 * C_p, N), jnp.float32),   # projected q/k/v
                pltpu.VMEM((C, N), jnp.float32),         # proj-output accumulator
            ],
        ),
        compiler_params=pltpu.CompilerParams(dimension_semantics=("parallel",)),
    )(x_flat, w_qkv_p, w_proj_t_p, params)

    return out_flat.reshape(B, C, H, W)


def self_attention_ref(x, w_qkv, w_proj, b_proj, gamma, beta, num_heads=8,
                       eps=1e-5):
    """Pure-JAX reference matching the PyTorch forward (eval mode)."""
    B, C, H, W = x.shape
    N = H * W
    hd = C // num_heads
    scale = hd ** -0.5

    x_flat = x.reshape(B, C, N).transpose(0, 2, 1)                   # (B, N, C)
    qkv = x_flat @ w_qkv.T                                           # (B, N, 3C)
    qkv = qkv.reshape(B, N, 3, num_heads, hd).transpose(2, 0, 3, 1, 4)
    q, k, v = qkv[0], qkv[1], qkv[2]                                 # (B, nh, N, hd)
    attn = (q @ jnp.swapaxes(k, -2, -1)) * scale
    attn = jax.nn.softmax(attn, axis=-1)
    xa = (attn @ v).transpose(0, 2, 1, 3).reshape(B, N, C)
    xa = xa @ w_proj.T + b_proj
    z = xa + x_flat
    mean = z.mean(-1, keepdims=True)
    var = ((z - mean) ** 2).mean(-1, keepdims=True)
    out = (z - mean) / jnp.sqrt(var + eps) * gamma + beta
    return out.transpose(0, 2, 1).reshape(B, C, H, W)


if __name__ == "__main__":
    key = jax.random.PRNGKey(0)
    ks = jax.random.split(key, 6)

    B, C, H, W = 2, 32, 16, 16          # dim=32, num_heads=8 -> head_dim=4, N=256
    num_heads = 8

    x = jax.random.normal(ks[0], (B, C, H, W), dtype=jnp.float32)
    w_qkv = jax.random.normal(ks[1], (3 * C, C), dtype=jnp.float32) * (C ** -0.5)
    w_proj = jax.random.normal(ks[2], (C, C), dtype=jnp.float32) * (C ** -0.5)
    b_proj = 0.02 * jax.random.normal(ks[3], (C,), dtype=jnp.float32)
    gamma = 1.0 + 0.1 * jax.random.normal(ks[4], (C,), dtype=jnp.float32)
    beta = 0.1 * jax.random.normal(ks[5], (C,), dtype=jnp.float32)

    out = self_attention(x, w_qkv, w_proj, b_proj, gamma, beta,
                         num_heads=num_heads)
    out = jax.block_until_ready(out)

    ref = jax.block_until_ready(
        self_attention_ref(x, w_qkv, w_proj, b_proj, gamma, beta, num_heads))

    assert out.shape == (B, C, H, W)
    assert jnp.allclose(out, ref, atol=2e-3, rtol=2e-3), "mismatch vs reference"

    print("KERNEL_OK")
</pallas_src>

<mosaic_0001>
module attributes {stable_mosaic.version = 11 : i64} {
  func.func @_self_attention_kernel(%arg0: i32, %arg1: memref<1x32x256xf32, #tpu.memory_space<vmem>>, %arg2: memref<192x32xf32, #tpu.memory_space<vmem>>, %arg3: memref<64x32xf32, #tpu.memory_space<vmem>>, %arg4: memref<3x32x1xf32, #tpu.memory_space<vmem>>, %arg5: memref<1x32x256xf32, #tpu.memory_space<vmem>>, %arg6: memref<192x256xf32, #tpu.memory_space<vmem>>, %arg7: memref<32x256xf32, #tpu.memory_space<vmem>>) attributes {dimension_semantics = [#tpu.dimension_semantics<parallel>], iteration_bounds = array<i64: 2>, scalar_prefetch = 0 : i64, scratch_operands = 2 : i64, tpu.core_type = #tpu.core_type<tc>, window_params = [{transform_indices = @transform_0, window_bounds = array<i64: 1, 32, 256>}, {pipeline_mode = #tpu.pipeline_mode<synchronous>, transform_indices = @transform_1, window_bounds = array<i64: 192, 32>}, {pipeline_mode = #tpu.pipeline_mode<synchronous>, transform_indices = @transform_2, window_bounds = array<i64: 64, 32>}, {pipeline_mode = #tpu.pipeline_mode<synchronous>, transform_indices = @transform_3, window_bounds = array<i64: 3, 32, 1>}, {transform_indices = @transform_4, window_bounds = array<i64: 1, 32, 256>}]} {
    %c0 = arith.constant 0 : index
    %c0_0 = arith.constant 0 : index
    %c0_1 = arith.constant 0 : index
    %0 = vector.load %arg1[%c0, %c0_0, %c0_1] : memref<1x32x256xf32, #tpu.memory_space<vmem>>, vector<1x32x256xf32>
    %1 = vector.shape_cast %0 : vector<1x32x256xf32> to vector<32x256xf32>
    %c0_2 = arith.constant 0 : index
    %c0_3 = arith.constant 0 : index
    %2 = vector.load %arg2[%c0_2, %c0_3] : memref<192x32xf32, #tpu.memory_space<vmem>>, vector<192x32xf32>
    %cst = arith.constant dense<0.000000e+00> : vector<192x256xf32>
    %3 = tpu.matmul %2, %1, %cst {dimension_numbers = #tpu.dot_dimension_numbers<[1], [0], [0], [1], [0, 0, 1, 1], [], []>} : vector<192x32xf32>, vector<32x256xf32>, vector<192x256xf32> -> vector<192x256xf32>
    %c0_4 = arith.constant 0 : index
    %c0_5 = arith.constant 0 : index
    %4 = vector.load %arg6[%c0_4, %c0_5] : memref<192x256xf32, #tpu.memory_space<vmem>>, vector<192x256xf32>
    tpu.vector_store %arg6[%c0_4, %c0_5], %3 {strides = array<i32>} : memref<192x256xf32, #tpu.memory_space<vmem>>, vector<192x256xf32>,
    %c0_6 = arith.constant 0 : index
    %c0_7 = arith.constant 0 : index
    %c0_8 = arith.constant 0 : index
    %5 = vector.load %arg4[%c0_6, %c0_7, %c0_8] : memref<3x32x1xf32, #tpu.memory_space<vmem>>, vector<1x32x1xf32>
    %6 = vector.shape_cast %5 : vector<1x32x1xf32> to vector<32x1xf32>
    %7 = vector.broadcast %6 : vector<32x1xf32> to vector<32x256xf32>
    %8 = arith.addf %1, %7 : vector<32x256xf32>
    %c0_9 = arith.constant 0 : index
    %c0_10 = arith.constant 0 : index
    %9 = vector.load %arg7[%c0_9, %c0_10] : memref<32x256xf32, #tpu.memory_space<vmem>>, vector<32x256xf32>
    tpu.vector_store %arg7[%c0_9, %c0_10], %8 {strides = array<i32>} : memref<32x256xf32, #tpu.memory_space<vmem>>, vector<32x256xf32>,
    %c0_i32 = arith.constant 0 : i32
    %c8_i32 = arith.constant 8 : i32
    %10 = arith.addi %c0_i32, %c8_i32 : i32
    %c1_i32 = arith.constant 1 : i32
    scf.for %arg8 = %c0_i32 to %10 step %c1_i32  : i32 {
      %c8_i32_26 = arith.constant 8 : i32
      %41 = arith.muli %arg8, %c8_i32_26 : i32
      %42 = tpu.assume_multiple %41, 8 : i32
      %c8_i32_27 = arith.constant 8 : i32
      %43 = arith.muli %arg8, %c8_i32_27 : i32
      %c64_i32 = arith.constant 64 : i32
      %44 = arith.addi %c64_i32, %43 : i32
      %45 = tpu.assume_multiple %44, 8 : i32
      %c8_i32_28 = arith.constant 8 : i32
      %46 = arith.muli %arg8, %c8_i32_28 : i32
      %c128_i32 = arith.constant 128 : i32
      %47 = arith.addi %c128_i32, %46 : i32
      %48 = tpu.assume_multiple %47, 8 : i32
      %49 = arith.index_cast %42 : i32 to index
      %c0_29 = arith.constant 0 : index
      %50 = vector.load %arg6[%49, %c0_29] : memref<192x256xf32, #tpu.memory_space<vmem>>, vector<8x256xf32>
      %51 = arith.index_cast %45 : i32 to index
      %c0_30 = arith.constant 0 : index
      %52 = vector.load %arg6[%51, %c0_30] : memref<192x256xf32, #tpu.memory_space<vmem>>, vector<8x256xf32>
      %53 = arith.index_cast %48 : i32 to index
      %c0_31 = arith.constant 0 : index
      %54 = vector.load %arg6[%53, %c0_31] : memref<192x256xf32, #tpu.memory_space<vmem>>, vector<8x256xf32>
      %cst_32 = arith.constant dense<0.000000e+00> : vector<256x256xf32>
      %55 = tpu.matmul %50, %52, %cst_32 {dimension_numbers = #tpu.dot_dimension_numbers<[0], [0], [1], [1], [0, 1, 1, 1], [], []>} : vector<8x256xf32>, vector<8x256xf32>, vector<256x256xf32> -> vector<256x256xf32>
      %cst_33 = arith.constant dense<0xFF800000> : vector<256xf32>
      %56 = vector.multi_reduction <maximumf>, %55, %cst_33 [1] : vector<256x256xf32> to vector<256xf32>
      %57 = vector.shape_cast %56 : vector<256xf32> to vector<256x1xf32>
      %58 = vector.broadcast %57 : vector<256x1xf32> to vector<256x256xf32>
      %59 = arith.subf %55, %58 : vector<256x256xf32>
      %60 = math.exp %59 : vector<256x256xf32>
      %cst_34 = arith.constant dense<0.000000e+00> : vector<256xf32>
      %61 = vector.multi_reduction <add>, %60, %cst_34 [1] : vector<256x256xf32> to vector<256xf32>
      %62 = vector.shape_cast %61 : vector<256xf32> to vector<256x1xf32>
      %cst_35 = arith.constant 1.000000e+00 : f32
      %63 = vector.broadcast %cst_35 : f32 to vector<256x1xf32>
      %64 = arith.divf %63, %62 : vector<256x1xf32>
      %65 = vector.broadcast %64 : vector<256x1xf32> to vector<256x256xf32>
      %66 = arith.mulf %60, %65 : vector<256x256xf32>
      %cst_36 = arith.constant dense<0.000000e+00> : vector<8x256xf32>
      %67 = tpu.matmul %54, %66, %cst_36 {dimension_numbers = #tpu.dot_dimension_numbers<[1], [1], [0], [0], [0, 0, 1, 0], [], []>} : vector<8x256xf32>, vector<256x256xf32>, vector<8x256xf32> -> vector<8x256xf32>
      %68 = arith.index_cast %42 : i32 to index
      %c0_37 = arith.constant 0 : index
      %69 = vector.load %arg3[%68, %c0_37] : memref<64x32xf32, #tpu.memory_space<vmem>>, vector<8x32xf32>
      %c0_38 = arith.constant 0 : index
      %c0_39 = arith.constant 0 : index
      %70 = vector.load %arg7[%c0_38, %c0_39] : memref<32x256xf32, #tpu.memory_space<vmem>>, vector<32x256xf32>
      %cst_40 = arith.constant dense<0.000000e+00> : vector<32x256xf32>
      %71 = tpu.matmul %69, %67, %cst_40 {dimension_numbers = #tpu.dot_dimension_numbers<[0], [0], [1], [1], [0, 1, 1, 1], [], []>} : vector<8x32xf32>, vector<8x256xf32>, vector<32x256xf32> -> vector<32x256xf32>
      %72 = arith.addf %70, %71 : vector<32x256xf32>
      %c0_41 = arith.constant 0 : index
      %c0_42 = arith.constant 0 : index
      %73 = vector.load %arg7[%c0_41, %c0_42] : memref<32x256xf32, #tpu.memory_space<vmem>>, vector<32x256xf32>
      tpu.vector_store %arg7[%c0_41, %c0_42], %72 {strides = array<i32>} : memref<32x256xf32, #tpu.memory_space<vmem>>, vector<32x256xf32>,
    }
    %c8_i32_11 = arith.constant 8 : i32
    %c0_12 = arith.constant 0 : index
    %c0_13 = arith.constant 0 : index
    %11 = vector.load %arg7[%c0_12, %c0_13] : memref<32x256xf32, #tpu.memory_space<vmem>>, vector<32x256xf32>
    %cst_14 = arith.constant dense<0.000000e+00> : vector<256xf32>
    %12 = vector.multi_reduction <add>, %11, %cst_14 [0] : vector<32x256xf32> to vector<256xf32>
    %13 = vector.shape_cast %12 : vector<256xf32> to vector<1x256xf32>
    %cst_15 = arith.constant 3.200000e+01 : f32
    %14 = vector.broadcast %cst_15 : f32 to vector<1x256xf32>
    %15 = arith.divf %13, %14 : vector<1x256xf32>
    %16 = vector.broadcast %15 : vector<1x256xf32> to vector<32x256xf32>
    %17 = arith.subf %11, %16 : vector<32x256xf32>
    %18 = arith.mulf %17, %17 : vector<32x256xf32>
    %cst_16 = arith.constant dense<0.000000e+00> : vector<256xf32>
    %19 = vector.multi_reduction <add>, %18, %cst_16 [0] : vector<32x256xf32> to vector<256xf32>
    %20 = vector.shape_cast %19 : vector<256xf32> to vector<1x256xf32>
    %cst_17 = arith.constant 3.200000e+01 : f32
    %21 = vector.broadcast %cst_17 : f32 to vector<1x256xf32>
    %22 = arith.divf %20, %21 : vector<1x256xf32>
    %23 = vector.broadcast %15 : vector<1x256xf32> to vector<32x256xf32>
    %24 = arith.subf %11, %23 : vector<32x256xf32>
    %cst_18 = arith.constant 9.99999974E-6 : f32
    %25 = vector.broadcast %cst_18 : f32 to vector<1x256xf32>
    %26 = arith.addf %22, %25 : vector<1x256xf32>
    %27 = math.rsqrt %26 : vector<1x256xf32>
    %28 = vector.broadcast %27 : vector<1x256xf32> to vector<32x256xf32>
    %29 = arith.mulf %24, %28 : vector<32x256xf32>
    %c1 = arith.constant 1 : index
    %c0_19 = arith.constant 0 : index
    %c0_20 = arith.constant 0 : index
    %30 = vector.load %arg4[%c1, %c0_19, %c0_20] : memref<3x32x1xf32, #tpu.memory_space<vmem>>, vector<1x32x1xf32>
    %31 = vector.shape_cast %30 : vector<1x32x1xf32> to vector<32x1xf32>
    %32 = vector.broadcast %31 : vector<32x1xf32> to vector<32x256xf32>
    %33 = arith.mulf %29, %32 : vector<32x256xf32>
    %c2 = arith.constant 2 : index
    %c0_21 = arith.constant 0 : index
    %c0_22 = arith.constant 0 : index
    %34 = vector.load %arg4[%c2, %c0_21, %c0_22] : memref<3x32x1xf32, #tpu.memory_space<vmem>>, vector<1x32x1xf32>
    %35 = vector.shape_cast %34 : vector<1x32x1xf32> to vector<32x1xf32>
    %36 = vector.broadcast %35 : vector<32x1xf32> to vector<32x256xf32>
    %37 = arith.addf %33, %36 : vector<32x256xf32>
    %c0_23 = arith.constant 0 : index
    %c0_24 = arith.constant 0 : index
    %c0_25 = arith.constant 0 : index
    %38 = vector.load %arg5[%c0_23, %c0_24, %c0_25] : memref<1x32x256xf32, #tpu.memory_space<vmem>>, vector<1x32x256xf32>
    %39 = vector.shape_cast %38 : vector<1x32x256xf32> to vector<32x256xf32>
    %40 = vector.shape_cast %37 : vector<32x256xf32> to vector<1x32x256xf32>
    tpu.vector_store %arg5[%c0_23, %c0_24, %c0_25], %40 {strides = array<i32>} : memref<1x32x256xf32, #tpu.memory_space<vmem>>, vector<1x32x256xf32>,
    return
  }
  func.func @transform_0(%arg0: i32) -> (i32, i32, i32) {
    %c0_i32 = arith.constant 0 : i32
    %c0_i32_0 = arith.constant 0 : i32
    %c0_i32_1 = arith.constant 0 : i32
    return %arg0, %c0_i32, %c0_i32_0 : i32, i32, i32
  }
  func.func @transform_1(%arg0: i32) -> (i32, i32) {
    %c0_i32 = arith.constant 0 : i32
    %c0_i32_0 = arith.constant 0 : i32
    %c0_i32_1 = arith.constant 0 : i32
    return %c0_i32, %c0_i32_0 : i32, i32
  }
  func.func @transform_2(%arg0: i32) -> (i32, i32) {
    %c0_i32 = arith.constant 0 : i32
    %c0_i32_0 = arith.constant 0 : i32
    %c0_i32_1 = arith.constant 0 : i32
    return %c0_i32, %c0_i32_0 : i32, i32
  }
  func.func @transform_3(%arg0: i32) -> (i32, i32, i32) {
    %c0_i32 = arith.constant 0 : i32
    %c0_i32_0 = arith.constant 0 : i32
    %c0_i32_1 = arith.constant 0 : i32
    %c0_i32_2 = arith.constant 0 : i32
    return %c0_i32, %c0_i32_0, %c0_i32_1 : i32, i32, i32
  }
  func.func @transform_4(%arg0: i32) -> (i32, i32, i32) {
    %c0_i32 = arith.constant 0 : i32
    %c0_i32_0 = arith.constant 0 : i32
    %c0_i32_1 = arith.constant 0 : i32
    return %arg0, %c0_i32, %c0_i32_0 : i32, i32, i32
  }
}

</mosaic_0001>

<llo_original>
// kernel: tpu_custom_call.1
$region0: #{tpu_custom_call.1}
  #allocation0 [shape = 'u32[]', space=smem, size = 0x4, offset = 0x4, fixed_abs, tag = 'smem constant byte address 0x4 - core index']
  #allocation1 [shape = 'u32[72,128]{1,0:T(1,128)}', space=vmem, size = 0x9000, scoped, tag = 'internal scratch']
  #allocation2 [shape = 'f32[192,256]{1,0:T(8,128)}', space=vmem, size = 0x30000, scoped, tag = 'scratch operand']
  #allocation3 [shape = 'f32[32,256]{1,0:T(8,128)}', space=vmem, size = 0x8000, scoped, tag = 'scratch operand']
  %s0 = inlined_call_operand.vmem [shape: f32[2,32,256], index: 0, kind: input, shape index: {}]
  %s1 = inlined_call_operand.vmem [shape: f32[192,32], index: 1, kind: input, shape index: {}]
  %s2 = inlined_call_operand.vmem [shape: f32[64,32], index: 2, kind: input, shape index: {}]
  %s3 = inlined_call_operand.vmem [shape: f32[3,32,1], index: 3, kind: input, shape index: {}]
  %s4 = inlined_call_operand.hbm [shape: f32[2,32,256], index: 4, kind: output, shape index: {}]
  %s5 = sld [smem:[#allocation0]]
  $region56: #{tpu_custom_call.1} parent=0
    _
  %s7 = ssub.s32 1, %s5
  %s8 = scalar_select 0, %s7, %s5
  $region1: #{tpu_custom_call.1} parent=0
    #allocation4 [shape = 'u8[65536]{0}', space=vmem, size = 0x10000, scoped, tag = 'output window, operand 0']
    #allocation5 [shape = 's32[2]{0}', space=sflag, size = 0x8, scoped, tag = 'scoped memory for tpu_custom_call.1']
    %9 = vsyncpa [#allocation5], 0
    %s10 = scalar_lea.sflag [#allocation5], 1
    %11 = vsyncpa %s10, 0
    loop: start=0, step=1, limit=4
    $region2: #{tpu_custom_call.1} parent=1 // loop_pre_header
      _
    $region3: #{tpu_custom_call.1} parent=1 // loop_header
      %s13 = sphi 0, %s17
      %p14 = scmp.ge.s32.totalorder %s13, 4
      %s23 = sphi 0, %s25
      %s26 = sphi 0, %s23
      %s27 = sphi 0, %s26
      %s43 = sphi 0, %s27
      %s47 = sphi 0, %s47
      %s49 = sphi 0, %s47
      %s50 = sphi 0, %s49
      %s64 = sphi 0, %s50
      %s68 = sphi 0, %s68
      %s70 = sphi 0, %s68
      %s71 = sphi 0, %s70
      %s85 = sphi 0, %s71
      %s89 = sphi 0, %s89
      %s91 = sphi 0, %s89
      %s92 = sphi 0, %s91
      %s106 = sphi 0, %s92
      %s112 = sphi 0, %s114
      %s115 = sphi 0, %s112
      %s116 = sphi 0, %s115
      %s132 = sphi 0, %s116
    $region4: #{tpu_custom_call.1} parent=1 // loop_header_branch
      %16 = sbr.rel (%p14) target = $region8
    $region5: #{tpu_custom_call.1} parent=1 // loop_body
      %s18 = ssub.s32 %s13, 1
      %s19 = ssub.s32 %s13, 2
      %s20 = sadd.s32 %s13, 1
      %s21 = ssub.s32 %s13, %s20
      %p22 = scmp.eq.s32.totalorder %s21, 0
      %s24 = sadd.s32 %s23, 1
      %s25 = scalar_select %p22, %s23, %s24
      %p28 = pneg %p22
      %p29 = scmp.eq.s32.totalorder %s13, 1
      %p30 = por %p28, %p29
      %p31 = scmp.ne.s32.totalorder %s23, %s26
      %p32 = scmp.eq.s32.totalorder %s13, 0
      %p33 = por %p31, %p32
      %p34 = scmp.ne.s32.totalorder %s23, %s26
      %p35 = scmp.eq.s32.totalorder %s18, 1
      %p36 = por %p34, %p35
      %p37 = scmp.ne.s32.totalorder %s26, %s27
      %p38 = scmp.eq.s32.totalorder %s18, 0
      %p39 = por %p37, %p38
      %p40 = scmp.ne.s32.totalorder %s26, %s27
      %p41 = scmp.eq.s32.totalorder %s19, 1
      %p42 = por %p40, %p41
      %p44 = scmp.ne.s32.totalorder %s27, %s43
      %p45 = scmp.eq.s32.totalorder %s19, 0
      %p46 = por %p44, %p45
      %s48 = sadd.s32 %s47, 1
      %p51 = scmp.eq.s32.totalorder %s13, 1
      %p52 = scmp.ne.s32.totalorder %s47, %s49
      %p53 = scmp.eq.s32.totalorder %s13, 0
      %p54 = por %p52, %p53
      %p55 = scmp.ne.s32.totalorder %s47, %s49
      %p56 = scmp.eq.s32.totalorder %s18, 1
      %p57 = por %p55, %p56
      %p58 = scmp.ne.s32.totalorder %s49, %s50
      %p59 = scmp.eq.s32.totalorder %s18, 0
      %p60 = por %p58, %p59
      %p61 = scmp.ne.s32.totalorder %s49, %s50
      %p62 = scmp.eq.s32.totalorder %s19, 1
      %p63 = por %p61, %p62
      %p65 = scmp.ne.s32.totalorder %s50, %s64
      %p66 = scmp.eq.s32.totalorder %s19, 0
      %p67 = por %p65, %p66
      %s69 = sadd.s32 %s68, 1
      %p72 = scmp.eq.s32.totalorder %s13, 1
      %p73 = scmp.ne.s32.totalorder %s68, %s70
      %p74 = scmp.eq.s32.totalorder %s13, 0
      %p75 = por %p73, %p74
      %p76 = scmp.ne.s32.totalorder %s68, %s70
      %p77 = scmp.eq.s32.totalorder %s18, 1
      %p78 = por %p76, %p77
      %p79 = scmp.ne.s32.totalorder %s70, %s71
      %p80 = scmp.eq.s32.totalorder %s18, 0
      %p81 = por %p79, %p80
      %p82 = scmp.ne.s32.totalorder %s70, %s71
      %p83 = scmp.eq.s32.totalorder %s19, 1
      %p84 = por %p82, %p83
      %p86 = scmp.ne.s32.totalorder %s71, %s85
      %p87 = scmp.eq.s32.totalorder %s19, 0
      %p88 = por %p86, %p87
      %s90 = sadd.s32 %s89, 1
      %p93 = scmp.eq.s32.totalorder %s13, 1
      %p94 = scmp.ne.s32.totalorder %s89, %s91
      %p95 = scmp.eq.s32.totalorder %s13, 0
      %p96 = por %p94, %p95
      %p97 = scmp.ne.s32.totalorder %s89, %s91
      %p98 = scmp.eq.s32.totalorder %s18, 1
      %p99 = por %p97, %p98
      %p100 = scmp.ne.s32.totalorder %s91, %s92
      %p101 = scmp.eq.s32.totalorder %s18, 0
      %p102 = por %p100, %p101
      %p103 = scmp.ne.s32.totalorder %s91, %s92
      %p104 = scmp.eq.s32.totalorder %s19, 1
      %p105 = por %p103, %p104
      %p107 = scmp.ne.s32.totalorder %s92, %s106
      %p108 = scmp.eq.s32.totalorder %s19, 0
      %p109 = por %p107, %p108
      %s110 = ssub.s32 %s13, %s20
      %p111 = scmp.eq.s32.totalorder %s110, 0
      %s113 = sadd.s32 %s112, 1
      %s114 = scalar_select %p111, %s112, %s113
      %p117 = pneg %p111
      %p118 = scmp.eq.s32.totalorder %s13, 1
      %p119 = por %p117, %p118
      %p120 = scmp.ne.s32.totalorder %s112, %s115
      %p121 = scmp.eq.s32.totalorder %s13, 0
      %p122 = por %p120, %p121
      %p123 = scmp.ne.s32.totalorder %s112, %s115
      %p124 = scmp.eq.s32.totalorder %s18, 1
      %p125 = por %p123, %p124
      %p126 = scmp.ne.s32.totalorder %s115, %s116
      %p127 = scmp.eq.s32.totalorder %s18, 0
      %p128 = por %p126, %p127
      %p129 = scmp.ne.s32.totalorder %s115, %s116
      %p130 = scmp.eq.s32.totalorder %s19, 1
      %p131 = por %p129, %p130
      %p133 = scmp.ne.s32.totalorder %s116, %s132
      %p134 = scmp.eq.s32.totalorder %s19, 0
      %p135 = por %p133, %p134
      %p136 = scmp.le.s32.totalorder 1, %s13
      %p137 = scmp.lt.s32.totalorder %s13, 3
      %p138 = pnand %p136, %p137
      %p139 = pneg %p138
      // Predicated region
      $region9: #{tpu_custom_call.1} parent=5 // pred_check
        _
      $region10: #{tpu_custom_call.1} parent=5 // pred_check_branch
        %141 = sbr.rel (%p138) target = $region12
      $region11: #{tpu_custom_call.1} parent=5 // pred_region
        %s142 = ssub.s32 %s13, 1
        // Predicated region
        $region13: #{tpu_custom_call.1} parent=11 // pred_check
          %p143 = pneg %p60
        $region14: #{tpu_custom_call.1} parent=11 // pred_check_branch
          %145 = sbr.rel (%p143) target = $region16
        $region15: #{tpu_custom_call.1} parent=11 // pred_region
          _
        $region16: #{tpu_custom_call.1} parent=11 // pred_fallthru
          _
        // Predicated region
        $region17: #{tpu_custom_call.1} parent=11 // pred_check
          %p146 = pneg %p81
        $region18: #{tpu_custom_call.1} parent=11 // pred_check_branch
          %148 = sbr.rel (%p146) target = $region20
        $region19: #{tpu_custom_call.1} parent=11 // pred_region
          _
        $region20: #{tpu_custom_call.1} parent=11 // pred_fallthru
          _
        // Predicated region
        $region21: #{tpu_custom_call.1} parent=11 // pred_check
          %p149 = pneg %p102
        $region22: #{tpu_custom_call.1} parent=11 // pred_check_branch
          %151 = sbr.rel (%p149) target = $region24
        $region23: #{tpu_custom_call.1} parent=11 // pred_region
          _
        $region24: #{tpu_custom_call.1} parent=11 // pred_fallthru
          _
      $region12: #{tpu_custom_call.1} parent=5 // pred_fallthru
        _
      %p152 = scmp.lt.s32.totalorder %s13, 2
      // Predicated region
      $region25: #{tpu_custom_call.1} parent=5 // pred_check
        %p153 = pneg %p152
      $region26: #{tpu_custom_call.1} parent=5 // pred_check_branch
        %155 = sbr.rel (%p153) target = $region28
      $region27: #{tpu_custom_call.1} parent=5 // pred_region
        // Predicated region
        $region29: #{tpu_custom_call.1} parent=27 // pred_check
          %p156 = pneg %p33
        $region30: #{tpu_custom_call.1} parent=27 // pred_check_branch
          %158 = sbr.rel (%p156) target = $region32
        $region31: #{tpu_custom_call.1} parent=27 // pred_region
          %p159 = scmp.lt.s32.totalorder %s13, 1
          %s160 = scalar_select %p159, %s13, 1
          %s161 = smul.addr %s160, 8
          %s162 = smul.addr %s161, 8
          %s163 = scalar_lea.vmem %s0, %s162
        $region32: #{tpu_custom_call.1} parent=27 // pred_fallthru
          _
      $region28: #{tpu_custom_call.1} parent=5 // pred_fallthru
        _
      %p164 = scmp.le.s32.totalorder 1, %s13
      %p165 = scmp.lt.s32.totalorder %s13, 3
      %p166 = pnand %p164, %p165
      %p167 = pneg %p166
      // Predicated region
      $region33: #{tpu_custom_call.1} parent=5 // pred_check
        _
      $region34: #{tpu_custom_call.1} parent=5 // pred_check_branch
        %169 = sbr.rel (%p166) target = $region36
      $region35: #{tpu_custom_call.1} parent=5 // pred_region
        %s170 = ssub.s32 %s13, 1
        %p171 = scmp.lt.s32.totalorder %s18, 1
        %s172 = scalar_select %p171, %s18, 1
        %s173 = smul.addr %s172, 8
        %s174 = smul.addr %s173, 8
        %s175 = scalar_lea.vmem %s0, %s174
        %p176 = pneg %p39
        %p177 = pneg %p36
        %p178 = pneg %p60
        %p179 = pneg %p57
        %p180 = pneg %p81
        %p181 = pneg %p78
        %p182 = pneg %p102
        %p183 = pneg %p99
        %p184 = pneg %p128
        %p185 = pneg %p125
        %s186 = sand.u32 %s115, 1
        %s187 = scalar_lea.sflag [#allocation5], %s186
        %s188 = sand.u32 %s115, 1
        %s189 = smul.addr %s188, 64
        %s190 = scalar_lea.vmem [#allocation4], %s189
        %p191 = scmp.lt.s32.totalorder %s18, 1
        %s192 = scalar_select %p191, %s18, 1
        %s193 = smul.addr %s192, 8
        %s194 = smul.addr %s193, 8
        %s195 = scalar_lea.vmem %s0, %s194
        %v196 = vld [vmem:[%s195] sm:$0xff]
        %v197 = vld [vmem:[%s195 + $0x8] sm:$0xff]
        %v198 = vld [vmem:[%s195 + $0x10] sm:$0xff]
        %v199 = vld [vmem:[%s195 + $0x18] sm:$0xff]
        %v200 = vld [vmem:[%s195 + $0x20] sm:$0xff]
        %v201 = vld [vmem:[%s195 + $0x28] sm:$0xff]
        %v202 = vld [vmem:[%s195 + $0x30] sm:$0xff]
        %v203 = vld [vmem:[%s195 + $0x38] sm:$0xff]
        %v204 = vld [vmem:[%s1] sm:$0xff]
        %v205 = vld [vmem:[%s1 + $0x8] sm:$0xff]
        %v206 = vld [vmem:[%s1 + $0x10] sm:$0xff]
        %v207 = vld [vmem:[%s1 + $0x18] sm:$0xff]
        %v208 = vld [vmem:[%s1 + $0x20] sm:$0xff]
        %v209 = vld [vmem:[%s1 + $0x28] sm:$0xff]
        %v210 = vld [vmem:[%s1 + $0x30] sm:$0xff]
        %v211 = vld [vmem:[%s1 + $0x38] sm:$0xff]
        %v212 = vld [vmem:[%s1 + $0x40] sm:$0xff]
        %v213 = vld [vmem:[%s1 + $0x48] sm:$0xff]
        %v214 = vld [vmem:[%s1 + $0x50] sm:$0xff]
        %v215 = vld [vmem:[%s1 + $0x58] sm:$0xff]
        %v216 = vld [vmem:[%s1 + $0x60] sm:$0xff]
        %v217 = vld [vmem:[%s1 + $0x68] sm:$0xff]
        %v218 = vld [vmem:[%s1 + $0x70] sm:$0xff]
        %v219 = vld [vmem:[%s1 + $0x78] sm:$0xff]
        %v220 = vld [vmem:[%s1 + $0x80] sm:$0xff]
        %v221 = vld [vmem:[%s1 + $0x88] sm:$0xff]
        %v222 = vld [vmem:[%s1 + $0x90] sm:$0xff]
        %v223 = vld [vmem:[%s1 + $0x98] sm:$0xff]
        %v224 = vld [vmem:[%s1 + $0xa0] sm:$0xff]
        %v225 = vld [vmem:[%s1 + $0xa8] sm:$0xff]
        %v226 = vld [vmem:[%s1 + $0xb0] sm:$0xff]
        %v227 = vld [vmem:[%s1 + $0xb8] sm:$0xff]
        %vm228 = vcmask 261120
        %v230 = vsel %vm228, %v204, 0
        %v233 = vsel %vm228, %v205, 0
        %v236 = vsel %vm228, %v206, 0
        %v239 = vsel %vm228, %v207, 0
        %v242 = vsel %vm228, %v208, 0
        %v245 = vsel %vm228, %v209, 0
        %v248 = vsel %vm228, %v210, 0
        %v251 = vsel %vm228, %v211, 0
        %v254 = vsel %vm228, %v212, 0
        %v257 = vsel %vm228, %v213, 0
        %v260 = vsel %vm228, %v214, 0
        %v263 = vsel %vm228, %v215, 0
        %v266 = vsel %vm228, %v216, 0
        %v269 = vsel %vm228, %v217, 0
        %v272 = vsel %vm228, %v218, 0
        %v275 = vsel %vm228, %v219, 0
        %v278 = vsel %vm228, %v220, 0
        %v281 = vsel %vm228, %v221, 0
        %v284 = vsel %vm228, %v222, 0
        %v287 = vsel %vm228, %v223, 0
        %v290 = vsel %vm228, %v224, 0
        %v293 = vsel %vm228, %v225, 0
        %v296 = vsel %vm228, %v226, 0
        %v299 = vsel %vm228, %v227, 0
        %301 = vmatpush.msra.mxu0 0.0
        %302 = vmatpush.msra.mxu0 0.0
        %303 = vmatpush.msra.mxu0 0.0
        %304 = vmatpush.msra.mxu0 0.0
        %305 = vmatpush.msra.mxu0 0.0
        %306 = vmatpush.msra.mxu0 0.0
        %307 = vmatpush.msra.mxu0 0.0
        %308 = vmatpush.msra.mxu0 0.0
        %309 = vmatpush.msra.mxu0 0.0
        %310 = vmatpush.msra.mxu0 0.0
        %311 = vmatpush.msra.mxu0 0.0
        %312 = vmatpush.msra.mxu0 0.0
        %313 = vmatpush.msra.mxu0 %v202
        %314 = vmatpush.msra.mxu0 %v200
        %315 = vmatpush.msra.mxu0 %v198
        %316 = vmatpush.msra.mxu0 %v196
        %317 = vmatmul.f32.gmra.mxu0 %v230
        %v318 = vpop.f32.mrf.mxu0
        %v319 = vadd.f32 0.0, %v318
        %320 = vmatmul.f32.gmra.mxu0 %v233
        %v321 = vpop.f32.mrf.mxu0
        %v322 = vadd.f32 0.0, %v321
        %323 = vmatmul.f32.gmra.mxu0 %v236
        %v324 = vpop.f32.mrf.mxu0
        %v325 = vadd.f32 0.0, %v324
        %326 = vmatmul.f32.gmra.mxu0 %v239
        %v327 = vpop.f32.mrf.mxu0
        %v328 = vadd.f32 0.0, %v327
        %329 = vmatmul.f32.gmra.mxu0 %v242
        %v330 = vpop.f32.mrf.mxu0
        %v331 = vadd.f32 0.0, %v330
        %332 = vmatmul.f32.gmra.mxu0 %v245
        %v333 = vpop.f32.mrf.mxu0
        %v334 = vadd.f32 0.0, %v333
        %335 = vmatmul.f32.gmra.mxu0 %v248
        %v336 = vpop.f32.mrf.mxu0
        %v337 = vadd.f32 0.0, %v336
        %338 = vmatmul.f32.gmra.mxu0 %v251
        %v339 = vpop.f32.mrf.mxu0
        %v340 = vadd.f32 0.0, %v339
        %341 = vmatmul.f32.gmra.mxu0 %v254
        %v342 = vpop.f32.mrf.mxu0
        %v343 = vadd.f32 0.0, %v342
        %344 = vmatmul.f32.gmra.mxu0 %v257
        %v345 = vpop.f32.mrf.mxu0
        %v346 = vadd.f32 0.0, %v345
        %347 = vmatmul.f32.gmra.mxu0 %v260
        %v348 = vpop.f32.mrf.mxu0
        %v349 = vadd.f32 0.0, %v348
        %350 = vmatmul.f32.gmra.mxu0 %v263
        %v351 = vpop.f32.mrf.mxu0
        %v352 = vadd.f32 0.0, %v351
        %353 = vmatmul.f32.gmra.mxu0 %v266
        %v354 = vpop.f32.mrf.mxu0
        %v355 = vadd.f32 0.0, %v354
        %356 = vmatmul.f32.gmra.mxu0 %v269
        %v357 = vpop.f32.mrf.mxu0
        %v358 = vadd.f32 0.0, %v357
        %359 = vmatmul.f32.gmra.mxu0 %v272
        %v360 = vpop.f32.mrf.mxu0
        %v361 = vadd.f32 0.0, %v360
        %362 = vmatmul.f32.gmra.mxu0 %v275
        %v363 = vpop.f32.mrf.mxu0
        %v364 = vadd.f32 0.0, %v363
        %365 = vmatmul.f32.gmra.mxu0 %v278
        %v366 = vpop.f32.mrf.mxu0
        %v367 = vadd.f32 0.0, %v366
        %368 = vmatmul.f32.gmra.mxu0 %v281
        %v369 = vpop.f32.mrf.mxu0
        %v370 = vadd.f32 0.0, %v369
        %371 = vmatmul.f32.gmra.mxu0 %v284
        %v372 = vpop.f32.mrf.mxu0
        %v373 = vadd.f32 0.0, %v372
        %374 = vmatmul.f32.gmra.mxu0 %v287
        %v375 = vpop.f32.mrf.mxu0
        %v376 = vadd.f32 0.0, %v375
        %377 = vmatmul.f32.gmra.mxu0 %v290
        %v378 = vpop.f32.mrf.mxu0
        %v379 = vadd.f32 0.0, %v378
        %380 = vmatmul.f32.gmra.mxu0 %v293
        %v381 = vpop.f32.mrf.mxu0
        %v382 = vadd.f32 0.0, %v381
        %383 = vmatmul.f32.gmra.mxu0 %v296
        %v384 = vpop.f32.mrf.mxu0
        %v385 = vadd.f32 0.0, %v384
        %386 = vmatmul.f32.gmra.mxu0 %v299
        %v387 = vpop.f32.mrf.mxu0
        %v388 = vadd.f32 0.0, %v387
        %389 = vdwg.mxu0
        %390 = vmatpush.msra.mxu0 0.0
        %391 = vmatpush.msra.mxu0 0.0
        %392 = vmatpush.msra.mxu0 0.0
        %393 = vmatpush.msra.mxu0 0.0
        %394 = vmatpush.msra.mxu0 0.0
        %395 = vmatpush.msra.mxu0 0.0
        %396 = vmatpush.msra.mxu0 0.0
        %397 = vmatpush.msra.mxu0 0.0
        %398 = vmatpush.msra.mxu0 0.0
        %399 = vmatpush.msra.mxu0 0.0
        %400 = vmatpush.msra.mxu0 0.0
        %401 = vmatpush.msra.mxu0 0.0
        %402 = vmatpush.msra.mxu0 %v203
        %403 = vmatpush.msra.mxu0 %v201
        %404 = vmatpush.msra.mxu0 %v199
        %405 = vmatpush.msra.mxu0 %v197
        %406 = vmatmul.f32.gmra.mxu0 %v230
        %v407 = vpop.f32.mrf.mxu0
        %v408 = vadd.f32 0.0, %v407
        %409 = vmatmul.f32.gmra.mxu0 %v233
        %v410 = vpop.f32.mrf.mxu0
        %v411 = vadd.f32 0.0, %v410
        %412 = vmatmul.f32.gmra.mxu0 %v236
        %v413 = vpop.f32.mrf.mxu0
        %v414 = vadd.f32 0.0, %v413
        %415 = vmatmul.f32.gmra.mxu0 %v239
        %v416 = vpop.f32.mrf.mxu0
        %v417 = vadd.f32 0.0, %v416
        %418 = vmatmul.f32.gmra.mxu0 %v242
        %v419 = vpop.f32.mrf.mxu0
        %v420 = vadd.f32 0.0, %v419
        %421 = vmatmul.f32.gmra.mxu0 %v245
        %v422 = vpop.f32.mrf.mxu0
        %v423 = vadd.f32 0.0, %v422
        %424 = vmatmul.f32.gmra.mxu0 %v248
        %v425 = vpop.f32.mrf.mxu0
        %v426 = vadd.f32 0.0, %v425
        %427 = vmatmul.f32.gmra.mxu0 %v251
        %v428 = vpop.f32.mrf.mxu0
        %v429 = vadd.f32 0.0, %v428
        %430 = vmatmul.f32.gmra.mxu0 %v254
        %v431 = vpop.f32.mrf.mxu0
        %v432 = vadd.f32 0.0, %v431
        %433 = vmatmul.f32.gmra.mxu0 %v257
        %v434 = vpop.f32.mrf.mxu0
        %v435 = vadd.f32 0.0, %v434
        %436 = vmatmul.f32.gmra.mxu0 %v260
        %v437 = vpop.f32.mrf.mxu0
        %v438 = vadd.f32 0.0, %v437
        %439 = vmatmul.f32.gmra.mxu0 %v263
        %v440 = vpop.f32.mrf.mxu0
        %v441 = vadd.f32 0.0, %v440
        %442 = vmatmul.f32.gmra.mxu0 %v266
        %v443 = vpop.f32.mrf.mxu0
        %v444 = vadd.f32 0.0, %v443
        %445 = vmatmul.f32.gmra.mxu0 %v269
        %v446 = vpop.f32.mrf.mxu0
        %v447 = vadd.f32 0.0, %v446
        %448 = vmatmul.f32.gmra.mxu0 %v272
        %v449 = vpop.f32.mrf.mxu0
        %v450 = vadd.f32 0.0, %v449
        %451 = vmatmul.f32.gmra.mxu0 %v275
        %v452 = vpop.f32.mrf.mxu0
        %v453 = vadd.f32 0.0, %v452
        %454 = vmatmul.f32.gmra.mxu0 %v278
        %v455 = vpop.f32.mrf.mxu0
        %v456 = vadd.f32 0.0, %v455
        %457 = vmatmul.f32.gmra.mxu0 %v281
        %v458 = vpop.f32.mrf.mxu0
        %v459 = vadd.f32 0.0, %v458
        %460 = vmatmul.f32.gmra.mxu0 %v284
        %v461 = vpop.f32.mrf.mxu0
        %v462 = vadd.f32 0.0, %v461
        %463 = vmatmul.f32.gmra.mxu0 %v287
        %v464 = vpop.f32.mrf.mxu0
        %v465 = vadd.f32 0.0, %v464
        %466 = vmatmul.f32.gmra.mxu0 %v290
        %v467 = vpop.f32.mrf.mxu0
        %v468 = vadd.f32 0.0, %v467
        %469 = vmatmul.f32.gmra.mxu0 %v293
        %v470 = vpop.f32.mrf.mxu0
        %v471 = vadd.f32 0.0, %v470
        %472 = vmatmul.f32.gmra.mxu0 %v296
        %v473 = vpop.f32.mrf.mxu0
        %v474 = vadd.f32 0.0, %v473
        %475 = vmatmul.f32.gmra.mxu0 %v299
        %v476 = vpop.f32.mrf.mxu0
        %v477 = vadd.f32 0.0, %v476
        %478 = vdwg.mxu0
        %479 = vst [vmem:[#allocation2] sm:$0xff] %v319
        %480 = vst [vmem:[#allocation2 + $0x8] sm:$0xff] %v408
        %481 = vst [vmem:[#allocation2 + $0x10] sm:$0xff] %v322
        %482 = vst [vmem:[#allocation2 + $0x18] sm:$0xff] %v411
        %483 = vst [vmem:[#allocation2 + $0x20] sm:$0xff] %v325
        %484 = vst [vmem:[#allocation2 + $0x28] sm:$0xff] %v414
        %485 = vst [vmem:[#allocation2 + $0x30] sm:$0xff] %v328
        %486 = vst [vmem:[#allocation2 + $0x38] sm:$0xff] %v417
        %487 = vst [vmem:[#allocation2 + $0x40] sm:$0xff] %v331
        %488 = vst [vmem:[#allocation2 + $0x48] sm:$0xff] %v420
        %489 = vst [vmem:[#allocation2 + $0x50] sm:$0xff] %v334
        %490 = vst [vmem:[#allocation2 + $0x58] sm:$0xff] %v423
        %491 = vst [vmem:[#allocation2 + $0x60] sm:$0xff] %v337
        %492 = vst [vmem:[#allocation2 + $0x68] sm:$0xff] %v426
        %493 = vst [vmem:[#allocation2 + $0x70] sm:$0xff] %v340
        %494 = vst [vmem:[#allocation2 + $0x78] sm:$0xff] %v429
        %495 = vst [vmem:[#allocation2 + $0x80] sm:$0xff] %v343
        %496 = vst [vmem:[#allocation2 + $0x88] sm:$0xff] %v432
        %497 = vst [vmem:[#allocation2 + $0x90] sm:$0xff] %v346
        %498 = vst [vmem:[#allocation2 + $0x98] sm:$0xff] %v435
        %499 = vst [vmem:[#allocation2 + $0xa0] sm:$0xff] %v349
        %500 = vst [vmem:[#allocation2 + $0xa8] sm:$0xff] %v438
        %501 = vst [vmem:[#allocation2 + $0xb0] sm:$0xff] %v352
        %502 = vst [vmem:[#allocation2 + $0xb8] sm:$0xff] %v441
        %503 = vst [vmem:[#allocation2 + $0xc0] sm:$0xff] %v355
        %504 = vst [vmem:[#allocation2 + $0xc8] sm:$0xff] %v444
        %505 = vst [vmem:[#allocation2 + $0xd0] sm:$0xff] %v358
        %506 = vst [vmem:[#allocation2 + $0xd8] sm:$0xff] %v447
        %507 = vst [vmem:[#allocation2 + $0xe0] sm:$0xff] %v361
        %508 = vst [vmem:[#allocation2 + $0xe8] sm:$0xff] %v450
        %509 = vst [vmem:[#allocation2 + $0xf0] sm:$0xff] %v364
        %510 = vst [vmem:[#allocation2 + $0xf8] sm:$0xff] %v453
        %511 = vst [vmem:[#allocation2 + $0x100] sm:$0xff] %v367
        %512 = vst [vmem:[#allocation2 + $0x108] sm:$0xff] %v456
        %513 = vst [vmem:[#allocation2 + $0x110] sm:$0xff] %v370
        %514 = vst [vmem:[#allocation2 + $0x118] sm:$0xff] %v459
        %515 = vst [vmem:[#allocation2 + $0x120] sm:$0xff] %v373
        %516 = vst [vmem:[#allocation2 + $0x128] sm:$0xff] %v462
        %517 = vst [vmem:[#allocation2 + $0x130] sm:$0xff] %v376
        %518 = vst [vmem:[#allocation2 + $0x138] sm:$0xff] %v465
        %519 = vst [vmem:[#allocation2 + $0x140] sm:$0xff] %v379
        %520 = vst [vmem:[#allocation2 + $0x148] sm:$0xff] %v468
        %521 = vst [vmem:[#allocation2 + $0x150] sm:$0xff] %v382
        %522 = vst [vmem:[#allocation2 + $0x158] sm:$0xff] %v471
        %523 = vst [vmem:[#allocation2 + $0x160] sm:$0xff] %v385
        %524 = vst [vmem:[#allocation2 + $0x168] sm:$0xff] %v474
        %525 = vst [vmem:[#allocation2 + $0x170] sm:$0xff] %v388
        %526 = vst [vmem:[#allocation2 + $0x178] sm:$0xff] %v477
        %v527 = vld [vmem:[%s3] sm:$0xff]
        %v528 = vld [vmem:[%s3 + $0x8] sm:$0xff]
        %v529 = vld [vmem:[%s3 + $0x10] sm:$0xff]
        %v530 = vld [vmem:[%s3 + $0x18] sm:$0xff]
        %532 = vset.pattern.permute.xlu0 0
        %533 = vperm.xlu0 %532, %v527
        %v534 = vpop.permute.xlu0 %533
        %537 = vset.pattern.permute.xlu0 0
        %538 = vperm.xlu0 %537, %v528
        %v539 = vpop.permute.xlu0 %538
        %542 = vset.pattern.permute.xlu0 0
        %543 = vperm.xlu0 %542, %v529
        %v544 = vpop.permute.xlu0 %543
        %547 = vset.pattern.permute.xlu0 0
        %548 = vperm.xlu0 %547, %v530
        %v549 = vpop.permute.xlu0 %548
        %v551 = vadd.f32 %v196, %v534
        %v552 = vadd.f32 %v197, %v534
        %v553 = vadd.f32 %v198, %v539
        %v554 = vadd.f32 %v199, %v539
        %v555 = vadd.f32 %v200, %v544
        %v556 = vadd.f32 %v201, %v544
        %v557 = vadd.f32 %v202, %v549
        %v558 = vadd.f32 %v203, %v549
        %559 = vst [vmem:[#allocation3] sm:$0xff] %v551
        %560 = vst [vmem:[#allocation3 + $0x8] sm:$0xff] %v552
        %561 = vst [vmem:[#allocation3 + $0x10] sm:$0xff] %v553
        %562 = vst [vmem:[#allocation3 + $0x18] sm:$0xff] %v554
        %563 = vst [vmem:[#allocation3 + $0x20] sm:$0xff] %v555
        %564 = vst [vmem:[#allocation3 + $0x28] sm:$0xff] %v556
        %565 = vst [vmem:[#allocation3 + $0x30] sm:$0xff] %v557
        %566 = vst [vmem:[#allocation3 + $0x38] sm:$0xff] %v558
        loop: start=0, step=1, limit=8
        $region37: #{tpu_custom_call.1} parent=35 // loop_pre_header
          _
        $region38: #{tpu_custom_call.1} parent=35 // loop_header
          %s568 = sphi 0, %s572
          %p569 = scmp.ge.s32.totalorder %s568, 8
        $region39: #{tpu_custom_call.1} parent=35 // loop_header_branch
          %571 = sbr.rel (%p569) target = $region43
        $region40: #{tpu_custom_call.1} parent=35 // loop_body
          %s573 = smul.u32 %s568, 8
          %s574 = sadd.s32 %s573, 64
          %s575 = sadd.s32 %s573, 128
          %s576 = sshra.s32 %s573, 3
          %s577 = sand.u32 %s573, 7
          %s578 = smul.u32 %s576, 2
          %s579 = smul.addr %s578, 8
          %s580 = scalar_lea.vmem [#allocation2], %s579
          %v581 = vld [vmem:[%s580] sm:$0xff]
          %v582 = vld [vmem:[%s580 + $0x8] sm:$0xff]
          %s583 = sshra.s32 %s574, 3
          %s584 = sand.u32 %s574, 7
          %s585 = smul.u32 %s583, 2
          %s586 = smul.addr %s585, 8
          %s587 = scalar_lea.vmem [#allocation2], %s586
          %v588 = vld [vmem:[%s587] sm:$0xff]
          %v589 = vld [vmem:[%s587 + $0x8] sm:$0xff]
          %s590 = sshra.s32 %s575, 3
          %s591 = sand.u32 %s575, 7
          %s592 = smul.u32 %s590, 2
          %s593 = smul.addr %s592, 8
          %s594 = scalar_lea.vmem [#allocation2], %s593
          %v595 = vld [vmem:[%s594] sm:$0xff]
          %v596 = vld [vmem:[%s594 + $0x8] sm:$0xff]
          %597 = vxpose.xlu0.b32.start [1/16] %v581, 128
          %598 = vxpose.xlu0.b32.cont [2/16] 0.0, 128
          %599 = vxpose.xlu0.b32.cont [3/16] 0.0, 128
          %600 = vxpose.xlu0.b32.cont [4/16] 0.0, 128
          %601 = vxpose.xlu0.b32.cont [5/16] 0.0, 128
          %602 = vxpose.xlu0.b32.cont [6/16] 0.0, 128
          %603 = vxpose.xlu0.b32.cont [7/16] 0.0, 128
          %604 = vxpose.xlu0.b32.cont [8/16] 0.0, 128
          %605 = vxpose.xlu0.b32.cont [9/16] 0.0, 128
          %606 = vxpose.xlu0.b32.cont [10/16] 0.0, 128
          %607 = vxpose.xlu0.b32.cont [11/16] 0.0, 128
          %608 = vxpose.xlu0.b32.cont [12/16] 0.0, 128
          %609 = vxpose.xlu0.b32.cont [13/16] 0.0, 128
          %610 = vxpose.xlu0.b32.cont [14/16] 0.0, 128
          %611 = vxpose.xlu0.b32.cont [15/16] 0.0, 128
          %612 = vxpose.xlu0.b32.end [16/16] 0.0, 128
          %v613 = vpop.trf.xlu0
          %v614 = vpop.trf.xlu0
          %v615 = vpop.trf.xlu0
          %v616 = vpop.trf.xlu0
          %v617 = vpop.trf.xlu0
          %v618 = vpop.trf.xlu0
          %v619 = vpop.trf.xlu0
          %v620 = vpop.trf.xlu0
          %v621 = vpop.trf.xlu0
          %v622 = vpop.trf.xlu0
          %v623 = vpop.trf.xlu0
          %v624 = vpop.trf.xlu0
          %v625 = vpop.trf.xlu0
          %v626 = vpop.trf.xlu0
          %v627 = vpop.trf.xlu0
          %v628 = vpop.trf.xlu0
          %629 = vxpose.xlu0.b32.start [1/16] %v582, 128
          %630 = vxpose.xlu0.b32.cont [2/16] 0.0, 128
          %631 = vxpose.xlu0.b32.cont [3/16] 0.0, 128
          %632 = vxpose.xlu0.b32.cont [4/16] 0.0, 128
          %633 = vxpose.xlu0.b32.cont [5/16] 0.0, 128
          %634 = vxpose.xlu0.b32.cont [6/16] 0.0, 128
          %635 = vxpose.xlu0.b32.cont [7/16] 0.0, 128
          %636 = vxpose.xlu0.b32.cont [8/16] 0.0, 128
          %637 = vxpose.xlu0.b32.cont [9/16] 0.0, 128
          %638 = vxpose.xlu0.b32.cont [10/16] 0.0, 128
          %639 = vxpose.xlu0.b32.cont [11/16] 0.0, 128
          %640 = vxpose.xlu0.b32.cont [12/16] 0.0, 128
          %641 = vxpose.xlu0.b32.cont [13/16] 0.0, 128
          %642 = vxpose.xlu0.b32.cont [14/16] 0.0, 128
          %643 = vxpose.xlu0.b32.cont [15/16] 0.0, 128
          %644 = vxpose.xlu0.b32.end [16/16] 0.0, 128
          %v645 = vpop.trf.xlu0
          %v646 = vpop.trf.xlu0
          %v647 = vpop.trf.xlu0
          %v648 = vpop.trf.xlu0
          %v649 = vpop.trf.xlu0
          %v650 = vpop.trf.xlu0
          %v651 = vpop.trf.xlu0
          %v652 = vpop.trf.xlu0
          %v653 = vpop.trf.xlu0
          %v654 = vpop.trf.xlu0
          %v655 = vpop.trf.xlu0
          %v656 = vpop.trf.xlu0
          %v657 = vpop.trf.xlu0
          %v658 = vpop.trf.xlu0
          %v659 = vpop.trf.xlu0
          %v660 = vpop.trf.xlu0
          %vm661 = vcmask 64512
          %v663 = vsel %vm661, %v613, 0
          %v666 = vsel %vm661, %v614, 0
          %v669 = vsel %vm661, %v615, 0
          %v672 = vsel %vm661, %v616, 0
          %v675 = vsel %vm661, %v617, 0
          %v678 = vsel %vm661, %v618, 0
          %v681 = vsel %vm661, %v619, 0
          %v684 = vsel %vm661, %v620, 0
          %v687 = vsel %vm661, %v621, 0
          %v690 = vsel %vm661, %v622, 0
          %v693 = vsel %vm661, %v623, 0
          %v696 = vsel %vm661, %v624, 0
          %v699 = vsel %vm661, %v625, 0
          %v702 = vsel %vm661, %v626, 0
          %v705 = vsel %vm661, %v627, 0
          %v708 = vsel %vm661, %v628, 0
          %v711 = vsel %vm661, %v645, 0
          %v714 = vsel %vm661, %v646, 0
          %v717 = vsel %vm661, %v647, 0
          %v720 = vsel %vm661, %v648, 0
          %v723 = vsel %vm661, %v649, 0
          %v726 = vsel %vm661, %v650, 0
          %v729 = vsel %vm661, %v651, 0
          %v732 = vsel %vm661, %v652, 0
          %v735 = vsel %vm661, %v653, 0
          %v738 = vsel %vm661, %v654, 0
          %v741 = vsel %vm661, %v655, 0
          %v744 = vsel %vm661, %v656, 0
          %v747 = vsel %vm661, %v657, 0
          %v750 = vsel %vm661, %v658, 0
          %v753 = vsel %vm661, %v659, 0
          %v756 = vsel %vm661, %v660, 0
          %758 = vmatpush.msra.mxu0 0.0
          %759 = vmatpush.msra.mxu0 0.0
          %760 = vmatpush.msra.mxu0 0.0
          %761 = vmatpush.msra.mxu0 0.0
          %762 = vmatpush.msra.mxu0 0.0
          %763 = vmatpush.msra.mxu0 0.0
          %764 = vmatpush.msra.mxu0 0.0
          %765 = vmatpush.msra.mxu0 0.0
          %766 = vmatpush.msra.mxu0 0.0
          %767 = vmatpush.msra.mxu0 0.0
          %768 = vmatpush.msra.mxu0 0.0
          %769 = vmatpush.msra.mxu0 0.0
          %770 = vmatpush.msra.mxu0 0.0
          %771 = vmatpush.msra.mxu0 0.0
          %772 = vmatpush.msra.mxu0 0.0
          %773 = vmatpush.msra.mxu0 %v588
          %774 = vmatmul.f32.gmra.mxu0 %v663
          %v775 = vpop.f32.mrf.mxu0
          %v776 = vadd.f32 0.0, %v775
          %777 = vmatmul.f32.gmra.mxu0 %v666
          %v778 = vpop.f32.mrf.mxu0
          %v779 = vadd.f32 0.0, %v778
          %780 = vmatmul.f32.gmra.mxu0 %v669
          %v781 = vpop.f32.mrf.mxu0
          %v782 = vadd.f32 0.0, %v781
          %783 = vmatmul.f32.gmra.mxu0 %v672
          %v784 = vpop.f32.mrf.mxu0
          %v785 = vadd.f32 0.0, %v784
          %786 = vmatmul.f32.gmra.mxu0 %v675
          %v787 = vpop.f32.mrf.mxu0
          %v788 = vadd.f32 0.0, %v787
          %789 = vmatmul.f32.gmra.mxu0 %v678
          %v790 = vpop.f32.mrf.mxu0
          %v791 = vadd.f32 0.0, %v790
          %792 = vmatmul.f32.gmra.mxu0 %v681
          %v793 = vpop.f32.mrf.mxu0
          %v794 = vadd.f32 0.0, %v793
          %795 = vmatmul.f32.gmra.mxu0 %v684
          %v796 = vpop.f32.mrf.mxu0
          %v797 = vadd.f32 0.0, %v796
          %798 = vmatmul.f32.gmra.mxu0 %v687
          %v799 = vpop.f32.mrf.mxu0
          %v800 = vadd.f32 0.0, %v799
          %801 = vmatmul.f32.gmra.mxu0 %v690
          %v802 = vpop.f32.mrf.mxu0
          %v803 = vadd.f32 0.0, %v802
          %804 = vmatmul.f32.gmra.mxu0 %v693
          %v805 = vpop.f32.mrf.mxu0
          %v806 = vadd.f32 0.0, %v805
          %807 = vmatmul.f32.gmra.mxu0 %v696
          %v808 = vpop.f32.mrf.mxu0
          %v809 = vadd.f32 0.0, %v808
          %810 = vmatmul.f32.gmra.mxu0 %v699
          %v811 = vpop.f32.mrf.mxu0
          %v812 = vadd.f32 0.0, %v811
          %813 = vmatmul.f32.gmra.mxu0 %v702
          %v814 = vpop.f32.mrf.mxu0
          %v815 = vadd.f32 0.0, %v814
          %816 = vmatmul.f32.gmra.mxu0 %v705
          %v817 = vpop.f32.mrf.mxu0
          %v818 = vadd.f32 0.0, %v817
          %819 = vmatmul.f32.gmra.mxu0 %v708
          %v820 = vpop.f32.mrf.mxu0
          %v821 = vadd.f32 0.0, %v820
          %822 = vmatmul.f32.gmra.mxu0 %v711
          %v823 = vpop.f32.mrf.mxu0
          %v824 = vadd.f32 0.0, %v823
          %825 = vmatmul.f32.gmra.mxu0 %v714
          %v826 = vpop.f32.mrf.mxu0
          %v827 = vadd.f32 0.0, %v826
          %828 = vmatmul.f32.gmra.mxu0 %v717
          %v829 = vpop.f32.mrf.mxu0
          %v830 = vadd.f32 0.0, %v829
          %831 = vmatmul.f32.gmra.mxu0 %v720
          %v832 = vpop.f32.mrf.mxu0
          %v833 = vadd.f32 0.0, %v832
          %834 = vmatmul.f32.gmra.mxu0 %v723
          %v835 = vpop.f32.mrf.mxu0
          %v836 = vadd.f32 0.0, %v835
          %837 = vmatmul.f32.gmra.mxu0 %v726
          %v838 = vpop.f32.mrf.mxu0
          %v839 = vadd.f32 0.0, %v838
          %840 = vmatmul.f32.gmra.mxu0 %v729
          %v841 = vpop.f32.mrf.mxu0
          %v842 = vadd.f32 0.0, %v841
          %843 = vmatmul.f32.gmra.mxu0 %v732
          %v844 = vpop.f32.mrf.mxu0
          %v845 = vadd.f32 0.0, %v844
          %846 = vmatmul.f32.gmra.mxu0 %v735
          %v847 = vpop.f32.mrf.mxu0
          %v848 = vadd.f32 0.0, %v847
          %849 = vmatmul.f32.gmra.mxu0 %v738
          %v850 = vpop.f32.mrf.mxu0
          %v851 = vadd.f32 0.0, %v850
          %852 = vmatmul.f32.gmra.mxu0 %v741
          %v853 = vpop.f32.mrf.mxu0
          %v854 = vadd.f32 0.0, %v853
          %855 = vmatmul.f32.gmra.mxu0 %v744
          %v856 = vpop.f32.mrf.mxu0
          %v857 = vadd.f32 0.0, %v856
          %858 = vmatmul.f32.gmra.mxu0 %v747
          %v859 = vpop.f32.mrf.mxu0
          %v860 = vadd.f32 0.0, %v859
          %861 = vmatmul.f32.gmra.mxu0 %v750
          %v862 = vpop.f32.mrf.mxu0
          %v863 = vadd.f32 0.0, %v862
          %864 = vmatmul.f32.gmra.mxu0 %v753
          %v865 = vpop.f32.mrf.mxu0
          %v866 = vadd.f32 0.0, %v865
          %867 = vmatmul.f32.gmra.mxu0 %v756
          %v868 = vpop.f32.mrf.mxu0
          %v869 = vadd.f32 0.0, %v868
          %870 = vdwg.mxu0
          %871 = vmatpush.msra.mxu0 0.0
          %872 = vmatpush.msra.mxu0 0.0
          %873 = vmatpush.msra.mxu0 0.0
          %874 = vmatpush.msra.mxu0 0.0
          %875 = vmatpush.msra.mxu0 0.0
          %876 = vmatpush.msra.mxu0 0.0
          %877 = vmatpush.msra.mxu0 0.0
          %878 = vmatpush.msra.mxu0 0.0
          %879 = vmatpush.msra.mxu0 0.0
          %880 = vmatpush.msra.mxu0 0.0
          %881 = vmatpush.msra.mxu0 0.0
          %882 = vmatpush.msra.mxu0 0.0
          %883 = vmatpush.msra.mxu0 0.0
          %884 = vmatpush.msra.mxu0 0.0
          %885 = vmatpush.msra.mxu0 0.0
          %886 = vmatpush.msra.mxu0 %v589
          %887 = vmatmul.f32.gmra.mxu0 %v663
          %v888 = vpop.f32.mrf.mxu0
          %v889 = vadd.f32 0.0, %v888
          %890 = vmatmul.f32.gmra.mxu0 %v666
          %v891 = vpop.f32.mrf.mxu0
          %v892 = vadd.f32 0.0, %v891
          %893 = vmatmul.f32.gmra.mxu0 %v669
          %v894 = vpop.f32.mrf.mxu0
          %v895 = vadd.f32 0.0, %v894
          %896 = vmatmul.f32.gmra.mxu0 %v672
          %v897 = vpop.f32.mrf.mxu0
          %v898 = vadd.f32 0.0, %v897
          %899 = vmatmul.f32.gmra.mxu0 %v675
          %v900 = vpop.f32.mrf.mxu0
          %v901 = vadd.f32 0.0, %v900
          %902 = vmatmul.f32.gmra.mxu0 %v678
          %v903 = vpop.f32.mrf.mxu0
          %v904 = vadd.f32 0.0, %v903
          %905 = vmatmul.f32.gmra.mxu0 %v681
          %v906 = vpop.f32.mrf.mxu0
          %v907 = vadd.f32 0.0, %v906
          %908 = vmatmul.f32.gmra.mxu0 %v684
          %v909 = vpop.f32.mrf.mxu0
          %v910 = vadd.f32 0.0, %v909
          %911 = vmatmul.f32.gmra.mxu0 %v687
          %v912 = vpop.f32.mrf.mxu0
          %v913 = vadd.f32 0.0, %v912
          %914 = vmatmul.f32.gmra.mxu0 %v690
          %v915 = vpop.f32.mrf.mxu0
          %v916 = vadd.f32 0.0, %v915
          %917 = vmatmul.f32.gmra.mxu0 %v693
          %v918 = vpop.f32.mrf.mxu0
          %v919 = vadd.f32 0.0, %v918
          %920 = vmatmul.f32.gmra.mxu0 %v696
          %v921 = vpop.f32.mrf.mxu0
          %v922 = vadd.f32 0.0, %v921
          %923 = vmatmul.f32.gmra.mxu0 %v699
          %v924 = vpop.f32.mrf.mxu0
          %v925 = vadd.f32 0.0, %v924
          %926 = vmatmul.f32.gmra.mxu0 %v702
          %v927 = vpop.f32.mrf.mxu0
          %v928 = vadd.f32 0.0, %v927
          %929 = vmatmul.f32.gmra.mxu0 %v705
          %v930 = vpop.f32.mrf.mxu0
          %v931 = vadd.f32 0.0, %v930
          %932 = vmatmul.f32.gmra.mxu0 %v708
          %v933 = vpop.f32.mrf.mxu0
          %v934 = vadd.f32 0.0, %v933
          %935 = vmatmul.f32.gmra.mxu0 %v711
          %v936 = vpop.f32.mrf.mxu0
          %v937 = vadd.f32 0.0, %v936
          %938 = vmatmul.f32.gmra.mxu0 %v714
          %v939 = vpop.f32.mrf.mxu0
          %v940 = vadd.f32 0.0, %v939
          %941 = vmatmul.f32.gmra.mxu0 %v717
          %v942 = vpop.f32.mrf.mxu0
          %v943 = vadd.f32 0.0, %v942
          %944 = vmatmul.f32.gmra.mxu0 %v720
          %v945 = vpop.f32.mrf.mxu0
          %v946 = vadd.f32 0.0, %v945
          %947 = vmatmul.f32.gmra.mxu0 %v723
          %v948 = vpop.f32.mrf.mxu0
          %v949 = vadd.f32 0.0, %v948
          %950 = vmatmul.f32.gmra.mxu0 %v726
          %v951 = vpop.f32.mrf.mxu0
          %v952 = vadd.f32 0.0, %v951
          %953 = vmatmul.f32.gmra.mxu0 %v729
          %v954 = vpop.f32.mrf.mxu0
          %v955 = vadd.f32 0.0, %v954
          %956 = vmatmul.f32.gmra.mxu0 %v732
          %v957 = vpop.f32.mrf.mxu0
          %v958 = vadd.f32 0.0, %v957
          %959 = vmatmul.f32.gmra.mxu0 %v735
          %v960 = vpop.f32.mrf.mxu0
          %v961 = vadd.f32 0.0, %v960
          %962 = vmatmul.f32.gmra.mxu0 %v738
          %v963 = vpop.f32.mrf.mxu0
          %v964 = vadd.f32 0.0, %v963
          %965 = vmatmul.f32.gmra.mxu0 %v741
          %v966 = vpop.f32.mrf.mxu0
          %v967 = vadd.f32 0.0, %v966
          %968 = vmatmul.f32.gmra.mxu0 %v744
          %v969 = vpop.f32.mrf.mxu0
          %v970 = vadd.f32 0.0, %v969
          %971 = vmatmul.f32.gmra.mxu0 %v747
          %v972 = vpop.f32.mrf.mxu0
          %v973 = vadd.f32 0.0, %v972
          %974 = vmatmul.f32.gmra.mxu0 %v750
          %v975 = vpop.f32.mrf.mxu0
          %v976 = vadd.f32 0.0, %v975
          %977 = vmatmul.f32.gmra.mxu0 %v753
          %v978 = vpop.f32.mrf.mxu0
          %v979 = vadd.f32 0.0, %v978
          %980 = vmatmul.f32.gmra.mxu0 %v756
          %v981 = vpop.f32.mrf.mxu0
          %v982 = vadd.f32 0.0, %v981
          %983 = vdwg.mxu0
          %v984 = vmax.f32 %v776, %v889
          %985 = vmax.xlane.f32.xlu0 %v984
          %v986 = vpop.xlane.xlu0 %985
          %v987 = vmax.f32 %v779, %v892
          %988 = vmax.xlane.f32.xlu0 %v987
          %v989 = vpop.xlane.xlu0 %988
          %v990 = vmax.f32 %v782, %v895
          %991 = vmax.xlane.f32.xlu0 %v990
          %v992 = vpop.xlane.xlu0 %991
          %v993 = vmax.f32 %v785, %v898
          %994 = vmax.xlane.f32.xlu0 %v993
          %v995 = vpop.xlane.xlu0 %994
          %v996 = vmax.f32 %v788, %v901
          %997 = vmax.xlane.f32.xlu0 %v996
          %v998 = vpop.xlane.xlu0 %997
          %v999 = vmax.f32 %v791, %v904
          %1000 = vmax.xlane.f32.xlu0 %v999
          %v1001 = vpop.xlane.xlu0 %1000
          %v1002 = vmax.f32 %v794, %v907
          %1003 = vmax.xlane.f32.xlu0 %v1002
          %v1004 = vpop.xlane.xlu0 %1003
          %v1005 = vmax.f32 %v797, %v910
          %1006 = vmax.xlane.f32.xlu0 %v1005
          %v1007 = vpop.xlane.xlu0 %1006
          %v1008 = vmax.f32 %v800, %v913
          %1009 = vmax.xlane.f32.xlu0 %v1008
          %v1010 = vpop.xlane.xlu0 %1009
          %v1011 = vmax.f32 %v803, %v916
          %1012 = vmax.xlane.f32.xlu0 %v1011
          %v1013 = vpop.xlane.xlu0 %1012
          %v1014 = vmax.f32 %v806, %v919
          %1015 = vmax.xlane.f32.xlu0 %v1014
          %v1016 = vpop.xlane.xlu0 %1015
          %v1017 = vmax.f32 %v809, %v922
          %1018 = vmax.xlane.f32.xlu0 %v1017
          %v1019 = vpop.xlane.xlu0 %1018
          %v1020 = vmax.f32 %v812, %v925
          %1021 = vmax.xlane.f32.xlu0 %v1020
          %v1022 = vpop.xlane.xlu0 %1021
          %v1023 = vmax.f32 %v815, %v928
          %1024 = vmax.xlane.f32.xlu0 %v1023
          %v1025 = vpop.xlane.xlu0 %1024
          %v1026 = vmax.f32 %v818, %v931
          %1027 = vmax.xlane.f32.xlu0 %v1026
          %v1028 = vpop.xlane.xlu0 %1027
          %v1029 = vmax.f32 %v821, %v934
          %1030 = vmax.xlane.f32.xlu0 %v1029
          %v1031 = vpop.xlane.xlu0 %1030
          %v1032 = vmax.f32 %v824, %v937
          %1033 = vmax.xlane.f32.xlu0 %v1032
          %v1034 = vpop.xlane.xlu0 %1033
          %v1035 = vmax.f32 %v827, %v940
          %1036 = vmax.xlane.f32.xlu0 %v1035
          %v1037 = vpop.xlane.xlu0 %1036
          %v1038 = vmax.f32 %v830, %v943
          %1039 = vmax.xlane.f32.xlu0 %v1038
          %v1040 = vpop.xlane.xlu0 %1039
          %v1041 = vmax.f32 %v833, %v946
          %1042 = vmax.xlane.f32.xlu0 %v1041
          %v1043 = vpop.xlane.xlu0 %1042
          %v1044 = vmax.f32 %v836, %v949
          %1045 = vmax.xlane.f32.xlu0 %v1044
          %v1046 = vpop.xlane.xlu0 %1045
          %v1047 = vmax.f32 %v839, %v952
          %1048 = vmax.xlane.f32.xlu0 %v1047
          %v1049 = vpop.xlane.xlu0 %1048
          %v1050 = vmax.f32 %v842, %v955
          %1051 = vmax.xlane.f32.xlu0 %v1050
          %v1052 = vpop.xlane.xlu0 %1051
          %v1053 = vmax.f32 %v845, %v958
          %1054 = vmax.xlane.f32.xlu0 %v1053
          %v1055 = vpop.xlane.xlu0 %1054
          %v1056 = vmax.f32 %v848, %v961
          %1057 = vmax.xlane.f32.xlu0 %v1056
          %v1058 = vpop.xlane.xlu0 %1057
          %v1059 = vmax.f32 %v851, %v964
          %1060 = vmax.xlane.f32.xlu0 %v1059
          %v1061 = vpop.xlane.xlu0 %1060
          %v1062 = vmax.f32 %v854, %v967
          %1063 = vmax.xlane.f32.xlu0 %v1062
          %v1064 = vpop.xlane.xlu0 %1063
          %v1065 = vmax.f32 %v857, %v970
          %1066 = vmax.xlane.f32.xlu0 %v1065
          %v1067 = vpop.xlane.xlu0 %1066
          %v1068 = vmax.f32 %v860, %v973
          %1069 = vmax.xlane.f32.xlu0 %v1068
          %v1070 = vpop.xlane.xlu0 %1069
          %v1071 = vmax.f32 %v863, %v976
          %1072 = vmax.xlane.f32.xlu0 %v1071
          %v1073 = vpop.xlane.xlu0 %1072
          %v1074 = vmax.f32 %v866, %v979
          %1075 = vmax.xlane.f32.xlu0 %v1074
          %v1076 = vpop.xlane.xlu0 %1075
          %v1077 = vmax.f32 %v869, %v982
          %1078 = vmax.xlane.f32.xlu0 %v1077
          %v1079 = vpop.xlane.xlu0 %1078
          %v1080 = vsub.f32 %v776, %v986
          %v1081 = vsub.f32 %v889, %v986
          %v1082 = vsub.f32 %v779, %v989
          %v1083 = vsub.f32 %v892, %v989
          %v1084 = vsub.f32 %v782, %v992
          %v1085 = vsub.f32 %v895, %v992
          %v1086 = vsub.f32 %v785, %v995
          %v1087 = vsub.f32 %v898, %v995
          %v1088 = vsub.f32 %v788, %v998
          %v1089 = vsub.f32 %v901, %v998
          %v1090 = vsub.f32 %v791, %v1001
          %v1091 = vsub.f32 %v904, %v1001
          %v1092 = vsub.f32 %v794, %v1004
          %v1093 = vsub.f32 %v907, %v1004
          %v1094 = vsub.f32 %v797, %v1007
          %v1095 = vsub.f32 %v910, %v1007
          %v1096 = vsub.f32 %v800, %v1010
          %v1097 = vsub.f32 %v913, %v1010
          %v1098 = vsub.f32 %v803, %v1013
          %v1099 = vsub.f32 %v916, %v1013
          %v1100 = vsub.f32 %v806, %v1016
          %v1101 = vsub.f32 %v919, %v1016
          %v1102 = vsub.f32 %v809, %v1019
          %v1103 = vsub.f32 %v922, %v1019
          %v1104 = vsub.f32 %v812, %v1022
          %v1105 = vsub.f32 %v925, %v1022
          %v1106 = vsub.f32 %v815, %v1025
          %v1107 = vsub.f32 %v928, %v1025
          %v1108 = vsub.f32 %v818, %v1028
          %v1109 = vsub.f32 %v931, %v1028
          %v1110 = vsub.f32 %v821, %v1031
          %v1111 = vsub.f32 %v934, %v1031
          %v1112 = vsub.f32 %v824, %v1034
          %v1113 = vsub.f32 %v937, %v1034
          %v1114 = vsub.f32 %v827, %v1037
          %v1115 = vsub.f32 %v940, %v1037
          %v1116 = vsub.f32 %v830, %v1040
          %v1117 = vsub.f32 %v943, %v1040
          %v1118 = vsub.f32 %v833, %v1043
          %v1119 = vsub.f32 %v946, %v1043
          %v1120 = vsub.f32 %v836, %v1046
          %v1121 = vsub.f32 %v949, %v1046
          %v1122 = vsub.f32 %v839, %v1049
          %v1123 = vsub.f32 %v952, %v1049
          %v1124 = vsub.f32 %v842, %v1052
          %v1125 = vsub.f32 %v955, %v1052
          %v1126 = vsub.f32 %v845, %v1055
          %v1127 = vsub.f32 %v958, %v1055
          %v1128 = vsub.f32 %v848, %v1058
          %v1129 = vsub.f32 %v961, %v1058
          %v1130 = vsub.f32 %v851, %v1061
          %v1131 = vsub.f32 %v964, %v1061
          %v1132 = vsub.f32 %v854, %v1064
          %v1133 = vsub.f32 %v967, %v1064
          %v1134 = vsub.f32 %v857, %v1067
          %v1135 = vsub.f32 %v970, %v1067
          %v1136 = vsub.f32 %v860, %v1070
          %v1137 = vsub.f32 %v973, %v1070
          %v1138 = vsub.f32 %v863, %v1073
          %v1139 = vsub.f32 %v976, %v1073
          %v1140 = vsub.f32 %v866, %v1076
          %v1141 = vsub.f32 %v979, %v1076
          %v1142 = vsub.f32 %v869, %v1079
          %v1143 = vsub.f32 %v982, %v1079
          %v1144 = vmul.f32 %v1080, 1.442695
          %v1145 = vpow.pop %v1144
          %v1146 = vmul.f32 %v1081, 1.442695
          %v1147 = vpow.pop %v1146
          %v1148 = vmul.f32 %v1082, 1.442695
          %v1149 = vpow.pop %v1148
          %v1150 = vmul.f32 %v1083, 1.442695
          %v1151 = vpow.pop %v1150
          %v1152 = vmul.f32 %v1084, 1.442695
          %v1153 = vpow.pop %v1152
          %v1154 = vmul.f32 %v1085, 1.442695
          %v1155 = vpow.pop %v1154
          %v1156 = vmul.f32 %v1086, 1.442695
          %v1157 = vpow.pop %v1156
          %v1158 = vmul.f32 %v1087, 1.442695
          %v1159 = vpow.pop %v1158
          %v1160 = vmul.f32 %v1088, 1.442695
          %v1161 = vpow.pop %v1160
          %v1162 = vmul.f32 %v1089, 1.442695
          %v1163 = vpow.pop %v1162
          %v1164 = vmul.f32 %v1090, 1.442695
          %v1165 = vpow.pop %v1164
          %v1166 = vmul.f32 %v1091, 1.442695
          %v1167 = vpow.pop %v1166
          %v1168 = vmul.f32 %v1092, 1.442695
          %v1169 = vpow.pop %v1168
          %v1170 = vmul.f32 %v1093, 1.442695
          %v1171 = vpow.pop %v1170
          %v1172 = vmul.f32 %v1094, 1.442695
          %v1173 = vpow.pop %v1172
          %v1174 = vmul.f32 %v1095, 1.442695
          %v1175 = vpow.pop %v1174
          %v1176 = vmul.f32 %v1096, 1.442695
          %v1177 = vpow.pop %v1176
          %v1178 = vmul.f32 %v1097, 1.442695
          %v1179 = vpow.pop %v1178
          %v1180 = vmul.f32 %v1098, 1.442695
          %v1181 = vpow.pop %v1180
          %v1182 = vmul.f32 %v1099, 1.442695
          %v1183 = vpow.pop %v1182
          %v1184 = vmul.f32 %v1100, 1.442695
          %v1185 = vpow.pop %v1184
          %v1186 = vmul.f32 %v1101, 1.442695
          %v1187 = vpow.pop %v1186
          %v1188 = vmul.f32 %v1102, 1.442695
          %v1189 = vpow.pop %v1188
          %v1190 = vmul.f32 %v1103, 1.442695
          %v1191 = vpow.pop %v1190
          %v1192 = vmul.f32 %v1104, 1.442695
          %v1193 = vpow.pop %v1192
          %v1194 = vmul.f32 %v1105, 1.442695
          %v1195 = vpow.pop %v1194
          %v1196 = vmul.f32 %v1106, 1.442695
          %v1197 = vpow.pop %v1196
          %v1198 = vmul.f32 %v1107, 1.442695
          %v1199 = vpow.pop %v1198
          %v1200 = vmul.f32 %v1108, 1.442695
          %v1201 = vpow.pop %v1200
          %v1202 = vmul.f32 %v1109, 1.442695
          %v1203 = vpow.pop %v1202
          %v1204 = vmul.f32 %v1110, 1.442695
          %v1205 = vpow.pop %v1204
          %v1206 = vmul.f32 %v1111, 1.442695
          %v1207 = vpow.pop %v1206
          %v1208 = vmul.f32 %v1112, 1.442695
          %v1209 = vpow.pop %v1208
          %v1210 = vmul.f32 %v1113, 1.442695
          %v1211 = vpow.pop %v1210
          %v1212 = vmul.f32 %v1114, 1.442695
          %v1213 = vpow.pop %v1212
          %v1214 = vmul.f32 %v1115, 1.442695
          %v1215 = vpow.pop %v1214
          %v1216 = vmul.f32 %v1116, 1.442695
          %v1217 = vpow.pop %v1216
          %v1218 = vmul.f32 %v1117, 1.442695
          %v1219 = vpow.pop %v1218
          %v1220 = vmul.f32 %v1118, 1.442695
          %v1221 = vpow.pop %v1220
          %v1222 = vmul.f32 %v1119, 1.442695
          %v1223 = vpow.pop %v1222
          %v1224 = vmul.f32 %v1120, 1.442695
          %v1225 = vpow.pop %v1224
          %v1226 = vmul.f32 %v1121, 1.442695
          %v1227 = vpow.pop %v1226
          %v1228 = vmul.f32 %v1122, 1.442695
          %v1229 = vpow.pop %v1228
          %v1230 = vmul.f32 %v1123, 1.442695
          %v1231 = vpow.pop %v1230
          %v1232 = vmul.f32 %v1124, 1.442695
          %v1233 = vpow.pop %v1232
          %v1234 = vmul.f32 %v1125, 1.442695
          %v1235 = vpow.pop %v1234
          %v1236 = vmul.f32 %v1126, 1.442695
          %v1237 = vpow.pop %v1236
          %v1238 = vmul.f32 %v1127, 1.442695
          %v1239 = vpow.pop %v1238
          %v1240 = vmul.f32 %v1128, 1.442695
          %v1241 = vpow.pop %v1240
          %v1242 = vmul.f32 %v1129, 1.442695
          %v1243 = vpow.pop %v1242
          %v1244 = vmul.f32 %v1130, 1.442695
          %v1245 = vpow.pop %v1244
          %v1246 = vmul.f32 %v1131, 1.442695
          %v1247 = vpow.pop %v1246
          %v1248 = vmul.f32 %v1132, 1.442695
          %v1249 = vpow.pop %v1248
          %v1250 = vmul.f32 %v1133, 1.442695
          %v1251 = vpow.pop %v1250
          %v1252 = vmul.f32 %v1134, 1.442695
          %v1253 = vpow.pop %v1252
          %v1254 = vmul.f32 %v1135, 1.442695
          %v1255 = vpow.pop %v1254
          %v1256 = vmul.f32 %v1136, 1.442695
          %v1257 = vpow.pop %v1256
          %v1258 = vmul.f32 %v1137, 1.442695
          %v1259 = vpow.pop %v1258
          %v1260 = vmul.f32 %v1138, 1.442695
          %v1261 = vpow.pop %v1260
          %v1262 = vmul.f32 %v1139, 1.442695
          %v1263 = vpow.pop %v1262
          %v1264 = vmul.f32 %v1140, 1.442695
          %v1265 = vpow.pop %v1264
          %v1266 = vmul.f32 %v1141, 1.442695
          %v1267 = vpow.pop %v1266
          %v1268 = vmul.f32 %v1142, 1.442695
          %v1269 = vpow.pop %v1268
          %v1270 = vmul.f32 %v1143, 1.442695
          %v1271 = vpow.pop %v1270
          %v1272 = vadd.f32 %v1145, %v1147
          %1273 = vadd.xlane.f32.xlu0 %v1272
          %v1274 = vpop.xlane.xlu0 %1273
          %v1275 = vadd.f32 %v1149, %v1151
          %1276 = vadd.xlane.f32.xlu0 %v1275
          %v1277 = vpop.xlane.xlu0 %1276
          %v1278 = vadd.f32 %v1153, %v1155
          %1279 = vadd.xlane.f32.xlu0 %v1278
          %v1280 = vpop.xlane.xlu0 %1279
          %v1281 = vadd.f32 %v1157, %v1159
          %1282 = vadd.xlane.f32.xlu0 %v1281
          %v1283 = vpop.xlane.xlu0 %1282
          %v1284 = vadd.f32 %v1161, %v1163
          %1285 = vadd.xlane.f32.xlu0 %v1284
          %v1286 = vpop.xlane.xlu0 %1285
          %v1287 = vadd.f32 %v1165, %v1167
          %1288 = vadd.xlane.f32.xlu0 %v1287
          %v1289 = vpop.xlane.xlu0 %1288
          %v1290 = vadd.f32 %v1169, %v1171
          %1291 = vadd.xlane.f32.xlu0 %v1290
          %v1292 = vpop.xlane.xlu0 %1291
          %v1293 = vadd.f32 %v1173, %v1175
          %1294 = vadd.xlane.f32.xlu0 %v1293
          %v1295 = vpop.xlane.xlu0 %1294
          %v1296 = vadd.f32 %v1177, %v1179
          %1297 = vadd.xlane.f32.xlu0 %v1296
          %v1298 = vpop.xlane.xlu0 %1297
          %v1299 = vadd.f32 %v1181, %v1183
          %1300 = vadd.xlane.f32.xlu0 %v1299
          %v1301 = vpop.xlane.xlu0 %1300
          %v1302 = vadd.f32 %v1185, %v1187
          %1303 = vadd.xlane.f32.xlu0 %v1302
          %v1304 = vpop.xlane.xlu0 %1303
          %v1305 = vadd.f32 %v1189, %v1191
          %1306 = vadd.xlane.f32.xlu0 %v1305
          %v1307 = vpop.xlane.xlu0 %1306
          %v1308 = vadd.f32 %v1193, %v1195
          %1309 = vadd.xlane.f32.xlu0 %v1308
          %v1310 = vpop.xlane.xlu0 %1309
          %v1311 = vadd.f32 %v1197, %v1199
          %1312 = vadd.xlane.f32.xlu0 %v1311
          %v1313 = vpop.xlane.xlu0 %1312
          %v1314 = vadd.f32 %v1201, %v1203
          %1315 = vadd.xlane.f32.xlu0 %v1314
          %v1316 = vpop.xlane.xlu0 %1315
          %v1317 = vadd.f32 %v1205, %v1207
          %1318 = vadd.xlane.f32.xlu0 %v1317
          %v1319 = vpop.xlane.xlu0 %1318
          %v1320 = vadd.f32 %v1209, %v1211
          %1321 = vadd.xlane.f32.xlu0 %v1320
          %v1322 = vpop.xlane.xlu0 %1321
          %v1323 = vadd.f32 %v1213, %v1215
          %1324 = vadd.xlane.f32.xlu0 %v1323
          %v1325 = vpop.xlane.xlu0 %1324
          %v1326 = vadd.f32 %v1217, %v1219
          %1327 = vadd.xlane.f32.xlu0 %v1326
          %v1328 = vpop.xlane.xlu0 %1327
          %v1329 = vadd.f32 %v1221, %v1223
          %1330 = vadd.xlane.f32.xlu0 %v1329
          %v1331 = vpop.xlane.xlu0 %1330
          %v1332 = vadd.f32 %v1225, %v1227
          %1333 = vadd.xlane.f32.xlu0 %v1332
          %v1334 = vpop.xlane.xlu0 %1333
          %v1335 = vadd.f32 %v1229, %v1231
          %1336 = vadd.xlane.f32.xlu0 %v1335
          %v1337 = vpop.xlane.xlu0 %1336
          %v1338 = vadd.f32 %v1233, %v1235
          %1339 = vadd.xlane.f32.xlu0 %v1338
          %v1340 = vpop.xlane.xlu0 %1339
          %v1341 = vadd.f32 %v1237, %v1239
          %1342 = vadd.xlane.f32.xlu0 %v1341
          %v1343 = vpop.xlane.xlu0 %1342
          %v1344 = vadd.f32 %v1241, %v1243
          %1345 = vadd.xlane.f32.xlu0 %v1344
          %v1346 = vpop.xlane.xlu0 %1345
          %v1347 = vadd.f32 %v1245, %v1247
          %1348 = vadd.xlane.f32.xlu0 %v1347
          %v1349 = vpop.xlane.xlu0 %1348
          %v1350 = vadd.f32 %v1249, %v1251
          %1351 = vadd.xlane.f32.xlu0 %v1350
          %v1352 = vpop.xlane.xlu0 %1351
          %v1353 = vadd.f32 %v1253, %v1255
          %1354 = vadd.xlane.f32.xlu0 %v1353
          %v1355 = vpop.xlane.xlu0 %1354
          %v1356 = vadd.f32 %v1257, %v1259
          %1357 = vadd.xlane.f32.xlu0 %v1356
          %v1358 = vpop.xlane.xlu0 %1357
          %v1359 = vadd.f32 %v1261, %v1263
          %1360 = vadd.xlane.f32.xlu0 %v1359
          %v1361 = vpop.xlane.xlu0 %1360
          %v1362 = vadd.f32 %v1265, %v1267
          %1363 = vadd.xlane.f32.xlu0 %v1362
          %v1364 = vpop.xlane.xlu0 %1363
          %v1365 = vadd.f32 %v1269, %v1271
          %1366 = vadd.xlane.f32.xlu0 %v1365
          %v1367 = vpop.xlane.xlu0 %1366
          %v1368 = vrcp.pop %v1274
          %v1369 = vmul.f32 %v1274, %v1368
          %v1370 = vsub.f32 1.0, %v1369
          %v1371 = vmul.f32 %v1368, %v1370
          %v1372 = vadd.f32 %v1368, %v1371
          %vm1373 = vweird.f32 %v1274
          %vm1374 = vweird.f32 %v1368
          %vm1375 = vmor %vm1373, %vm1374
          %v1376 = vsel %vm1375, %v1368, %v1372
          %v1377 = vand.u32 2147483647, %v1274
          %vm1378 = vcmp.eq.f32.partialorder %v1377, 8.507059e+37
          %v1379 = vand.u32 %v1274, 2147483648
          %v1380 = vor.u32 1.1754944e-38, %v1379
          %v1381 = vsel %vm1378, %v1380, %v1376
          %v1382 = vmul.f32 1.0, %v1381
          %v1383 = vrcp.pop %v1277
          %v1384 = vmul.f32 %v1277, %v1383
          %v1385 = vsub.f32 1.0, %v1384
          %v1386 = vmul.f32 %v1383, %v1385
          %v1387 = vadd.f32 %v1383, %v1386
          %vm1388 = vweird.f32 %v1277
          %vm1389 = vweird.f32 %v1383
          %vm1390 = vmor %vm1388, %vm1389
          %v1391 = vsel %vm1390, %v1383, %v1387
          %v1392 = vand.u32 2147483647, %v1277
          %vm1393 = vcmp.eq.f32.partialorder %v1392, 8.507059e+37
          %v1394 = vand.u32 %v1277, 2147483648
          %v1395 = vor.u32 1.1754944e-38, %v1394
          %v1396 = vsel %vm1393, %v1395, %v1391
          %v1397 = vmul.f32 1.0, %v1396
          %v1398 = vrcp.pop %v1280
          %v1399 = vmul.f32 %v1280, %v1398
          %v1400 = vsub.f32 1.0, %v1399
          %v1401 = vmul.f32 %v1398, %v1400
          %v1402 = vadd.f32 %v1398, %v1401
          %vm1403 = vweird.f32 %v1280
          %vm1404 = vweird.f32 %v1398
          %vm1405 = vmor %vm1403, %vm1404
          %v1406 = vsel %vm1405, %v1398, %v1402
          %v1407 = vand.u32 2147483647, %v1280
          %vm1408 = vcmp.eq.f32.partialorder %v1407, 8.507059e+37
          %v1409 = vand.u32 %v1280, 2147483648
          %v1410 = vor.u32 1.1754944e-38, %v1409
          %v1411 = vsel %vm1408, %v1410, %v1406
          %v1412 = vmul.f32 1.0, %v1411
          %v1413 = vrcp.pop %v1283
          %v1414 = vmul.f32 %v1283, %v1413
          %v1415 = vsub.f32 1.0, %v1414
          %v1416 = vmul.f32 %v1413, %v1415
          %v1417 = vadd.f32 %v1413, %v1416
          %vm1418 = vweird.f32 %v1283
          %vm1419 = vweird.f32 %v1413
          %vm1420 = vmor %vm1418, %vm1419
          %v1421 = vsel %vm1420, %v1413, %v1417
          %v1422 = vand.u32 2147483647, %v1283
          %vm1423 = vcmp.eq.f32.partialorder %v1422, 8.507059e+37
          %v1424 = vand.u32 %v1283, 2147483648
          %v1425 = vor.u32 1.1754944e-38, %v1424
          %v1426 = vsel %vm1423, %v1425, %v1421
          %v1427 = vmul.f32 1.0, %v1426
          %v1428 = vrcp.pop %v1286
          %v1429 = vmul.f32 %v1286, %v1428
          %v1430 = vsub.f32 1.0, %v1429
          %v1431 = vmul.f32 %v1428, %v1430
          %v1432 = vadd.f32 %v1428, %v1431
          %vm1433 = vweird.f32 %v1286
          %vm1434 = vweird.f32 %v1428
          %vm1435 = vmor %vm1433, %vm1434
          %v1436 = vsel %vm1435, %v1428, %v1432
          %v1437 = vand.u32 2147483647, %v1286
          %vm1438 = vcmp.eq.f32.partialorder %v1437, 8.507059e+37
          %v1439 = vand.u32 %v1286, 2147483648
          %v1440 = vor.u32 1.1754944e-38, %v1439
          %v1441 = vsel %vm1438, %v1440, %v1436
          %v1442 = vmul.f32 1.0, %v1441
          %v1443 = vrcp.pop %v1289
          %v1444 = vmul.f32 %v1289, %v1443
          %v1445 = vsub.f32 1.0, %v1444
          %v1446 = vmul.f32 %v1443, %v1445
          %v1447 = vadd.f32 %v1443, %v1446
          %vm1448 = vweird.f32 %v1289
          %vm1449 = vweird.f32 %v1443
          %vm1450 = vmor %vm1448, %vm1449
          %v1451 = vsel %vm1450, %v1443, %v1447
          %v1452 = vand.u32 2147483647, %v1289
          %vm1453 = vcmp.eq.f32.partialorder %v1452, 8.507059e+37
          %v1454 = vand.u32 %v1289, 2147483648
          %v1455 = vor.u32 1.1754944e-38, %v1454
          %v1456 = vsel %vm1453, %v1455, %v1451
          %v1457 = vmul.f32 1.0, %v1456
          %v1458 = vrcp.pop %v1292
          %v1459 = vmul.f32 %v1292, %v1458
          %v1460 = vsub.f32 1.0, %v1459
          %v1461 = vmul.f32 %v1458, %v1460
          %v1462 = vadd.f32 %v1458, %v1461
          %vm1463 = vweird.f32 %v1292
          %vm1464 = vweird.f32 %v1458
          %vm1465 = vmor %vm1463, %vm1464
          %v1466 = vsel %vm1465, %v1458, %v1462
          %v1467 = vand.u32 2147483647, %v1292
          %vm1468 = vcmp.eq.f32.partialorder %v1467, 8.507059e+37
          %v1469 = vand.u32 %v1292, 2147483648
          %v1470 = vor.u32 1.1754944e-38, %v1469
          %v1471 = vsel %vm1468, %v1470, %v1466
          %v1472 = vmul.f32 1.0, %v1471
          %v1473 = vrcp.pop %v1295
          %v1474 = vmul.f32 %v1295, %v1473
          %v1475 = vsub.f32 1.0, %v1474
          %v1476 = vmul.f32 %v1473, %v1475
          %v1477 = vadd.f32 %v1473, %v1476
          %vm1478 = vweird.f32 %v1295
          %vm1479 = vweird.f32 %v1473
          %vm1480 = vmor %vm1478, %vm1479
          %v1481 = vsel %vm1480, %v1473, %v1477
          %v1482 = vand.u32 2147483647, %v1295
          %vm1483 = vcmp.eq.f32.partialorder %v1482, 8.507059e+37
          %v1484 = vand.u32 %v1295, 2147483648
          %v1485 = vor.u32 1.1754944e-38, %v1484
          %v1486 = vsel %vm1483, %v1485, %v1481
          %v1487 = vmul.f32 1.0, %v1486
          %v1488 = vrcp.pop %v1298
          %v1489 = vmul.f32 %v1298, %v1488
          %v1490 = vsub.f32 1.0, %v1489
          %v1491 = vmul.f32 %v1488, %v1490
          %v1492 = vadd.f32 %v1488, %v1491
          %vm1493 = vweird.f32 %v1298
          %vm1494 = vweird.f32 %v1488
          %vm1495 = vmor %vm1493, %vm1494
          %v1496 = vsel %vm1495, %v1488, %v1492
          %v1497 = vand.u32 2147483647, %v1298
          %vm1498 = vcmp.eq.f32.partialorder %v1497, 8.507059e+37
          %v1499 = vand.u32 %v1298, 2147483648
          %v1500 = vor.u32 1.1754944e-38, %v1499
          %v1501 = vsel %vm1498, %v1500, %v1496
          %v1502 = vmul.f32 1.0, %v1501
          %v1503 = vrcp.pop %v1301
          %v1504 = vmul.f32 %v1301, %v1503
          %v1505 = vsub.f32 1.0, %v1504
          %v1506 = vmul.f32 %v1503, %v1505
          %v1507 = vadd.f32 %v1503, %v1506
          %vm1508 = vweird.f32 %v1301
          %vm1509 = vweird.f32 %v1503
          %vm1510 = vmor %vm1508, %vm1509
          %v1511 = vsel %vm1510, %v1503, %v1507
          %v1512 = vand.u32 2147483647, %v1301
          %vm1513 = vcmp.eq.f32.partialorder %v1512, 8.507059e+37
          %v1514 = vand.u32 %v1301, 2147483648
          %v1515 = vor.u32 1.1754944e-38, %v1514
          %v1516 = vsel %vm1513, %v1515, %v1511
          %v1517 = vmul.f32 1.0, %v1516
          %v1518 = vrcp.pop %v1304
          %v1519 = vmul.f32 %v1304, %v1518
          %v1520 = vsub.f32 1.0, %v1519
          %v1521 = vmul.f32 %v1518, %v1520
          %v1522 = vadd.f32 %v1518, %v1521
          %vm1523 = vweird.f32 %v1304
          %vm1524 = vweird.f32 %v1518
          %vm1525 = vmor %vm1523, %vm1524
          %v1526 = vsel %vm1525, %v1518, %v1522
          %v1527 = vand.u32 2147483647, %v1304
          %vm1528 = vcmp.eq.f32.partialorder %v1527, 8.507059e+37
          %v1529 = vand.u32 %v1304, 2147483648
          %v1530 = vor.u32 1.1754944e-38, %v1529
          %v1531 = vsel %vm1528, %v1530, %v1526
          %v1532 = vmul.f32 1.0, %v1531
          %v1533 = vrcp.pop %v1307
          %v1534 = vmul.f32 %v1307, %v1533
          %v1535 = vsub.f32 1.0, %v1534
          %v1536 = vmul.f32 %v1533, %v1535
          %v1537 = vadd.f32 %v1533, %v1536
          %vm1538 = vweird.f32 %v1307
          %vm1539 = vweird.f32 %v1533
          %vm1540 = vmor %vm1538, %vm1539
          %v1541 = vsel %vm1540, %v1533, %v1537
          %v1542 = vand.u32 2147483647, %v1307
          %vm1543 = vcmp.eq.f32.partialorder %v1542, 8.507059e+37
          %v1544 = vand.u32 %v1307, 2147483648
          %v1545 = vor.u32 1.1754944e-38, %v1544
          %v1546 = vsel %vm1543, %v1545, %v1541
          %v1547 = vmul.f32 1.0, %v1546
          %v1548 = vrcp.pop %v1310
          %v1549 = vmul.f32 %v1310, %v1548
          %v1550 = vsub.f32 1.0, %v1549
          %v1551 = vmul.f32 %v1548, %v1550
          %v1552 = vadd.f32 %v1548, %v1551
          %vm1553 = vweird.f32 %v1310
          %vm1554 = vweird.f32 %v1548
          %vm1555 = vmor %vm1553, %vm1554
          %v1556 = vsel %vm1555, %v1548, %v1552
          %v1557 = vand.u32 2147483647, %v1310
          %vm1558 = vcmp.eq.f32.partialorder %v1557, 8.507059e+37
          %v1559 = vand.u32 %v1310, 2147483648
          %v1560 = vor.u32 1.1754944e-38, %v1559
          %v1561 = vsel %vm1558, %v1560, %v1556
          %v1562 = vmul.f32 1.0, %v1561
          %v1563 = vrcp.pop %v1313
          %v1564 = vmul.f32 %v1313, %v1563
          %v1565 = vsub.f32 1.0, %v1564
          %v1566 = vmul.f32 %v1563, %v1565
          %v1567 = vadd.f32 %v1563, %v1566
          %vm1568 = vweird.f32 %v1313
          %vm1569 = vweird.f32 %v1563
          %vm1570 = vmor %vm1568, %vm1569
          %v1571 = vsel %vm1570, %v1563, %v1567
          %v1572 = vand.u32 2147483647, %v1313
          %vm1573 = vcmp.eq.f32.partialorder %v1572, 8.507059e+37
          %v1574 = vand.u32 %v1313, 2147483648
          %v1575 = vor.u32 1.1754944e-38, %v1574
          %v1576 = vsel %vm1573, %v1575, %v1571
          %v1577 = vmul.f32 1.0, %v1576
          %v1578 = vrcp.pop %v1316
          %v1579 = vmul.f32 %v1316, %v1578
          %v1580 = vsub.f32 1.0, %v1579
          %v1581 = vmul.f32 %v1578, %v1580
          %v1582 = vadd.f32 %v1578, %v1581
          %vm1583 = vweird.f32 %v1316
          %vm1584 = vweird.f32 %v1578
          %vm1585 = vmor %vm1583, %vm1584
          %v1586 = vsel %vm1585, %v1578, %v1582
          %v1587 = vand.u32 2147483647, %v1316
          %vm1588 = vcmp.eq.f32.partialorder %v1587, 8.507059e+37
          %v1589 = vand.u32 %v1316, 2147483648
          %v1590 = vor.u32 1.1754944e-38, %v1589
          %v1591 = vsel %vm1588, %v1590, %v1586
          %v1592 = vmul.f32 1.0, %v1591
          %v1593 = vrcp.pop %v1319
          %v1594 = vmul.f32 %v1319, %v1593
          %v1595 = vsub.f32 1.0, %v1594
          %v1596 = vmul.f32 %v1593, %v1595
          %v1597 = vadd.f32 %v1593, %v1596
          %vm1598 = vweird.f32 %v1319
          %vm1599 = vweird.f32 %v1593
          %vm1600 = vmor %vm1598, %vm1599
          %v1601 = vsel %vm1600, %v1593, %v1597
          %v1602 = vand.u32 2147483647, %v1319
          %vm1603 = vcmp.eq.f32.partialorder %v1602, 8.507059e+37
          %v1604 = vand.u32 %v1319, 2147483648
          %v1605 = vor.u32 1.1754944e-38, %v1604
          %v1606 = vsel %vm1603, %v1605, %v1601
          %v1607 = vmul.f32 1.0, %v1606
          %v1608 = vrcp.pop %v1322
          %v1609 = vmul.f32 %v1322, %v1608
          %v1610 = vsub.f32 1.0, %v1609
          %v1611 = vmul.f32 %v1608, %v1610
          %v1612 = vadd.f32 %v1608, %v1611
          %vm1613 = vweird.f32 %v1322
          %vm1614 = vweird.f32 %v1608
          %vm1615 = vmor %vm1613, %vm1614
          %v1616 = vsel %vm1615, %v1608, %v1612
          %v1617 = vand.u32 2147483647, %v1322
          %vm1618 = vcmp.eq.f32.partialorder %v1617, 8.507059e+37
          %v1619 = vand.u32 %v1322, 2147483648
          %v1620 = vor.u32 1.1754944e-38, %v1619
          %v1621 = vsel %vm1618, %v1620, %v1616
          %v1622 = vmul.f32 1.0, %v1621
          %v1623 = vrcp.pop %v1325
          %v1624 = vmul.f32 %v1325, %v1623
          %v1625 = vsub.f32 1.0, %v1624
          %v1626 = vmul.f32 %v1623, %v1625
          %v1627 = vadd.f32 %v1623, %v1626
          %vm1628 = vweird.f32 %v1325
          %vm1629 = vweird.f32 %v1623
          %vm1630 = vmor %vm1628, %vm1629
          %v1631 = vsel %vm1630, %v1623, %v1627
          %v1632 = vand.u32 2147483647, %v1325
          %vm1633 = vcmp.eq.f32.partialorder %v1632, 8.507059e+37
          %v1634 = vand.u32 %v1325, 2147483648
          %v1635 = vor.u32 1.1754944e-38, %v1634
          %v1636 = vsel %vm1633, %v1635, %v1631
          %v1637 = vmul.f32 1.0, %v1636
          %v1638 = vrcp.pop %v1328
          %v1639 = vmul.f32 %v1328, %v1638
          %v1640 = vsub.f32 1.0, %v1639
          %v1641 = vmul.f32 %v1638, %v1640
          %v1642 = vadd.f32 %v1638, %v1641
          %vm1643 = vweird.f32 %v1328
          %vm1644 = vweird.f32 %v1638
          %vm1645 = vmor %vm1643, %vm1644
          %v1646 = vsel %vm1645, %v1638, %v1642
          %v1647 = vand.u32 2147483647, %v1328
          %vm1648 = vcmp.eq.f32.partialorder %v1647, 8.507059e+37
          %v1649 = vand.u32 %v1328, 2147483648
          %v1650 = vor.u32 1.1754944e-38, %v1649
          %v1651 = vsel %vm1648, %v1650, %v1646
          %v1652 = vmul.f32 1.0, %v1651
          %v1653 = vrcp.pop %v1331
          %v1654 = vmul.f32 %v1331, %v1653
          %v1655 = vsub.f32 1.0, %v1654
          %v1656 = vmul.f32 %v1653, %v1655
          %v1657 = vadd.f32 %v1653, %v1656
          %vm1658 = vweird.f32 %v1331
          %vm1659 = vweird.f32 %v1653
          %vm1660 = vmor %vm1658, %vm1659
          %v1661 = vsel %vm1660, %v1653, %v1657
          %v1662 = vand.u32 2147483647, %v1331
          %vm1663 = vcmp.eq.f32.partialorder %v1662, 8.507059e+37
          %v1664 = vand.u32 %v1331, 2147483648
          %v1665 = vor.u32 1.1754944e-38, %v1664
          %v1666 = vsel %vm1663, %v1665, %v1661
          %v1667 = vmul.f32 1.0, %v1666
          %v1668 = vrcp.pop %v1334
          %v1669 = vmul.f32 %v1334, %v1668
          %v1670 = vsub.f32 1.0, %v1669
          %v1671 = vmul.f32 %v1668, %v1670
          %v1672 = vadd.f32 %v1668, %v1671
          %vm1673 = vweird.f32 %v1334
          %vm1674 = vweird.f32 %v1668
          %vm1675 = vmor %vm1673, %vm1674
          %v1676 = vsel %vm1675, %v1668, %v1672
          %v1677 = vand.u32 2147483647, %v1334
          %vm1678 = vcmp.eq.f32.partialorder %v1677, 8.507059e+37
          %v1679 = vand.u32 %v1334, 2147483648
          %v1680 = vor.u32 1.1754944e-38, %v1679
          %v1681 = vsel %vm1678, %v1680, %v1676
          %v1682 = vmul.f32 1.0, %v1681
          %v1683 = vrcp.pop %v1337
          %v1684 = vmul.f32 %v1337, %v1683
          %v1685 = vsub.f32 1.0, %v1684
          %v1686 = vmul.f32 %v1683, %v1685
          %v1687 = vadd.f32 %v1683, %v1686
          %vm1688 = vweird.f32 %v1337
          %vm1689 = vweird.f32 %v1683
          %vm1690 = vmor %vm1688, %vm1689
          %v1691 = vsel %vm1690, %v1683, %v1687
          %v1692 = vand.u32 2147483647, %v1337
          %vm1693 = vcmp.eq.f32.partialorder %v1692, 8.507059e+37
          %v1694 = vand.u32 %v1337, 2147483648
          %v1695 = vor.u32 1.1754944e-38, %v1694
          %v1696 = vsel %vm1693, %v1695, %v1691
          %v1697 = vmul.f32 1.0, %v1696
          %v1698 = vrcp.pop %v1340
          %v1699 = vmul.f32 %v1340, %v1698
          %v1700 = vsub.f32 1.0, %v1699
          %v1701 = vmul.f32 %v1698, %v1700
          %v1702 = vadd.f32 %v1698, %v1701
          %vm1703 = vweird.f32 %v1340
          %vm1704 = vweird.f32 %v1698
          %vm1705 = vmor %vm1703, %vm1704
          %v1706 = vsel %vm1705, %v1698, %v1702
          %v1707 = vand.u32 2147483647, %v1340
          %vm1708 = vcmp.eq.f32.partialorder %v1707, 8.507059e+37
          %v1709 = vand.u32 %v1340, 2147483648
          %v1710 = vor.u32 1.1754944e-38, %v1709
          %v1711 = vsel %vm1708, %v1710, %v1706
          %v1712 = vmul.f32 1.0, %v1711
          %v1713 = vrcp.pop %v1343
          %v1714 = vmul.f32 %v1343, %v1713
          %v1715 = vsub.f32 1.0, %v1714
          %v1716 = vmul.f32 %v1713, %v1715
          %v1717 = vadd.f32 %v1713, %v1716
          %vm1718 = vweird.f32 %v1343
          %vm1719 = vweird.f32 %v1713
          %vm1720 = vmor %vm1718, %vm1719
          %v1721 = vsel %vm1720, %v1713, %v1717
          %v1722 = vand.u32 2147483647, %v1343
          %vm1723 = vcmp.eq.f32.partialorder %v1722, 8.507059e+37
          %v1724 = vand.u32 %v1343, 2147483648
          %v1725 = vor.u32 1.1754944e-38, %v1724
          %v1726 = vsel %vm1723, %v1725, %v1721
          %v1727 = vmul.f32 1.0, %v1726
          %v1728 = vrcp.pop %v1346
          %v1729 = vmul.f32 %v1346, %v1728
          %v1730 = vsub.f32 1.0, %v1729
          %v1731 = vmul.f32 %v1728, %v1730
          %v1732 = vadd.f32 %v1728, %v1731
          %vm1733 = vweird.f32 %v1346
          %vm1734 = vweird.f32 %v1728
          %vm1735 = vmor %vm1733, %vm1734
          %v1736 = vsel %vm1735, %v1728, %v1732
          %v1737 = vand.u32 2147483647, %v1346
          %vm1738 = vcmp.eq.f32.partialorder %v1737, 8.507059e+37
          %v1739 = vand.u32 %v1346, 2147483648
          %v1740 = vor.u32 1.1754944e-38, %v1739
          %v1741 = vsel %vm1738, %v1740, %v1736
          %v1742 = vmul.f32 1.0, %v1741
          %v1743 = vrcp.pop %v1349
          %v1744 = vmul.f32 %v1349, %v1743
          %v1745 = vsub.f32 1.0, %v1744
          %v1746 = vmul.f32 %v1743, %v1745
          %v1747 = vadd.f32 %v1743, %v1746
          %vm1748 = vweird.f32 %v1349
          %vm1749 = vweird.f32 %v1743
          %vm1750 = vmor %vm1748, %vm1749
          %v1751 = vsel %vm1750, %v1743, %v1747
          %v1752 = vand.u32 2147483647, %v1349
          %vm1753 = vcmp.eq.f32.partialorder %v1752, 8.507059e+37
          %v1754 = vand.u32 %v1349, 2147483648
          %v1755 = vor.u32 1.1754944e-38, %v1754
          %v1756 = vsel %vm1753, %v1755, %v1751
          %v1757 = vmul.f32 1.0, %v1756
          %v1758 = vrcp.pop %v1352
          %v1759 = vmul.f32 %v1352, %v1758
          %v1760 = vsub.f32 1.0, %v1759
          %v1761 = vmul.f32 %v1758, %v1760
          %v1762 = vadd.f32 %v1758, %v1761
          %vm1763 = vweird.f32 %v1352
          %vm1764 = vweird.f32 %v1758
          %vm1765 = vmor %vm1763, %vm1764
          %v1766 = vsel %vm1765, %v1758, %v1762
          %v1767 = vand.u32 2147483647, %v1352
          %vm1768 = vcmp.eq.f32.partialorder %v1767, 8.507059e+37
          %v1769 = vand.u32 %v1352, 2147483648
          %v1770 = vor.u32 1.1754944e-38, %v1769
          %v1771 = vsel %vm1768, %v1770, %v1766
          %v1772 = vmul.f32 1.0, %v1771
          %v1773 = vrcp.pop %v1355
          %v1774 = vmul.f32 %v1355, %v1773
          %v1775 = vsub.f32 1.0, %v1774
          %v1776 = vmul.f32 %v1773, %v1775
          %v1777 = vadd.f32 %v1773, %v1776
          %vm1778 = vweird.f32 %v1355
          %vm1779 = vweird.f32 %v1773
          %vm1780 = vmor %vm1778, %vm1779
          %v1781 = vsel %vm1780, %v1773, %v1777
          %v1782 = vand.u32 2147483647, %v1355
          %vm1783 = vcmp.eq.f32.partialorder %v1782, 8.507059e+37
          %v1784 = vand.u32 %v1355, 2147483648
          %v1785 = vor.u32 1.1754944e-38, %v1784
          %v1786 = vsel %vm1783, %v1785, %v1781
          %v1787 = vmul.f32 1.0, %v1786
          %v1788 = vrcp.pop %v1358
          %v1789 = vmul.f32 %v1358, %v1788
          %v1790 = vsub.f32 1.0, %v1789
          %v1791 = vmul.f32 %v1788, %v1790
          %v1792 = vadd.f32 %v1788, %v1791
          %vm1793 = vweird.f32 %v1358
          %vm1794 = vweird.f32 %v1788
          %vm1795 = vmor %vm1793, %vm1794
          %v1796 = vsel %vm1795, %v1788, %v1792
          %v1797 = vand.u32 2147483647, %v1358
          %vm1798 = vcmp.eq.f32.partialorder %v1797, 8.507059e+37
          %v1799 = vand.u32 %v1358, 2147483648
          %v1800 = vor.u32 1.1754944e-38, %v1799
          %v1801 = vsel %vm1798, %v1800, %v1796
          %v1802 = vmul.f32 1.0, %v1801
          %v1803 = vrcp.pop %v1361
          %v1804 = vmul.f32 %v1361, %v1803
          %v1805 = vsub.f32 1.0, %v1804
          %v1806 = vmul.f32 %v1803, %v1805
          %v1807 = vadd.f32 %v1803, %v1806
          %vm1808 = vweird.f32 %v1361
          %vm1809 = vweird.f32 %v1803
          %vm1810 = vmor %vm1808, %vm1809
          %v1811 = vsel %vm1810, %v1803, %v1807
          %v1812 = vand.u32 2147483647, %v1361
          %vm1813 = vcmp.eq.f32.partialorder %v1812, 8.507059e+37
          %v1814 = vand.u32 %v1361, 2147483648
          %v1815 = vor.u32 1.1754944e-38, %v1814
          %v1816 = vsel %vm1813, %v1815, %v1811
          %v1817 = vmul.f32 1.0, %v1816
          %v1818 = vrcp.pop %v1364
          %v1819 = vmul.f32 %v1364, %v1818
          %v1820 = vsub.f32 1.0, %v1819
          %v1821 = vmul.f32 %v1818, %v1820
          %v1822 = vadd.f32 %v1818, %v1821
          %vm1823 = vweird.f32 %v1364
          %vm1824 = vweird.f32 %v1818
          %vm1825 = vmor %vm1823, %vm1824
          %v1826 = vsel %vm1825, %v1818, %v1822
          %v1827 = vand.u32 2147483647, %v1364
          %vm1828 = vcmp.eq.f32.partialorder %v1827, 8.507059e+37
          %v1829 = vand.u32 %v1364, 2147483648
          %v1830 = vor.u32 1.1754944e-38, %v1829
          %v1831 = vsel %vm1828, %v1830, %v1826
          %v1832 = vmul.f32 1.0, %v1831
          %v1833 = vrcp.pop %v1367
          %v1834 = vmul.f32 %v1367, %v1833
          %v1835 = vsub.f32 1.0, %v1834
          %v1836 = vmul.f32 %v1833, %v1835
          %v1837 = vadd.f32 %v1833, %v1836
          %vm1838 = vweird.f32 %v1367
          %vm1839 = vweird.f32 %v1833
          %vm1840 = vmor %vm1838, %vm1839
          %v1841 = vsel %vm1840, %v1833, %v1837
          %v1842 = vand.u32 2147483647, %v1367
          %vm1843 = vcmp.eq.f32.partialorder %v1842, 8.507059e+37
          %v1844 = vand.u32 %v1367, 2147483648
          %v1845 = vor.u32 1.1754944e-38, %v1844
          %v1846 = vsel %vm1843, %v1845, %v1841
          %v1847 = vmul.f32 1.0, %v1846
          %v1848 = vmul.f32 %v1145, %v1382
          %v1849 = vmul.f32 %v1147, %v1382
          %v1850 = vmul.f32 %v1149, %v1397
          %v1851 = vmul.f32 %v1151, %v1397
          %v1852 = vmul.f32 %v1153, %v1412
          %v1853 = vmul.f32 %v1155, %v1412
          %v1854 = vmul.f32 %v1157, %v1427
          %v1855 = vmul.f32 %v1159, %v1427
          %v1856 = vmul.f32 %v1161, %v1442
          %v1857 = vmul.f32 %v1163, %v1442
          %v1858 = vmul.f32 %v1165, %v1457
          %v1859 = vmul.f32 %v1167, %v1457
          %v1860 = vmul.f32 %v1169, %v1472
          %v1861 = vmul.f32 %v1171, %v1472
          %v1862 = vmul.f32 %v1173, %v1487
          %v1863 = vmul.f32 %v1175, %v1487
          %v1864 = vmul.f32 %v1177, %v1502
          %v1865 = vmul.f32 %v1179, %v1502
          %v1866 = vmul.f32 %v1181, %v1517
          %v1867 = vmul.f32 %v1183, %v1517
          %v1868 = vmul.f32 %v1185, %v1532
          %v1869 = vmul.f32 %v1187, %v1532
          %v1870 = vmul.f32 %v1189, %v1547
          %v1871 = vmul.f32 %v1191, %v1547
          %v1872 = vmul.f32 %v1193, %v1562
          %v1873 = vmul.f32 %v1195, %v1562
          %v1874 = vmul.f32 %v1197, %v1577
          %v1875 = vmul.f32 %v1199, %v1577
          %v1876 = vmul.f32 %v1201, %v1592
          %v1877 = vmul.f32 %v1203, %v1592
          %v1878 = vmul.f32 %v1205, %v1607
          %v1879 = vmul.f32 %v1207, %v1607
          %v1880 = vmul.f32 %v1209, %v1622
          %v1881 = vmul.f32 %v1211, %v1622
          %v1882 = vmul.f32 %v1213, %v1637
          %v1883 = vmul.f32 %v1215, %v1637
          %v1884 = vmul.f32 %v1217, %v1652
          %v1885 = vmul.f32 %v1219, %v1652
          %v1886 = vmul.f32 %v1221, %v1667
          %v1887 = vmul.f32 %v1223, %v1667
          %v1888 = vmul.f32 %v1225, %v1682
          %v1889 = vmul.f32 %v1227, %v1682
          %v1890 = vmul.f32 %v1229, %v1697
          %v1891 = vmul.f32 %v1231, %v1697
          %v1892 = vmul.f32 %v1233, %v1712
          %v1893 = vmul.f32 %v1235, %v1712
          %v1894 = vmul.f32 %v1237, %v1727
          %v1895 = vmul.f32 %v1239, %v1727
          %v1896 = vmul.f32 %v1241, %v1742
          %v1897 = vmul.f32 %v1243, %v1742
          %v1898 = vmul.f32 %v1245, %v1757
          %v1899 = vmul.f32 %v1247, %v1757
          %v1900 = vmul.f32 %v1249, %v1772
          %v1901 = vmul.f32 %v1251, %v1772
          %v1902 = vmul.f32 %v1253, %v1787
          %v1903 = vmul.f32 %v1255, %v1787
          %v1904 = vmul.f32 %v1257, %v1802
          %v1905 = vmul.f32 %v1259, %v1802
          %v1906 = vmul.f32 %v1261, %v1817
          %v1907 = vmul.f32 %v1263, %v1817
          %v1908 = vmul.f32 %v1265, %v1832
          %v1909 = vmul.f32 %v1267, %v1832
          %v1910 = vmul.f32 %v1269, %v1847
          %v1911 = vmul.f32 %v1271, %v1847
          %1912 = vmatpush.xpose.msra.mxu0 %v1878
          %1913 = vmatpush.xpose.msra.mxu0 %v1876
          %1914 = vmatpush.xpose.msra.mxu0 %v1874
          %1915 = vmatpush.xpose.msra.mxu0 %v1872
          %1916 = vmatpush.xpose.msra.mxu0 %v1870
          %1917 = vmatpush.xpose.msra.mxu0 %v1868
          %1918 = vmatpush.xpose.msra.mxu0 %v1866
          %1919 = vmatpush.xpose.msra.mxu0 %v1864
          %1920 = vmatpush.xpose.msra.mxu0 %v1862
          %1921 = vmatpush.xpose.msra.mxu0 %v1860
          %1922 = vmatpush.xpose.msra.mxu0 %v1858
          %1923 = vmatpush.xpose.msra.mxu0 %v1856
          %1924 = vmatpush.xpose.msra.mxu0 %v1854
          %1925 = vmatpush.xpose.msra.mxu0 %v1852
          %1926 = vmatpush.xpose.msra.mxu0 %v1850
          %1927 = vmatpush.xpose.msra.mxu0 %v1848
          %1928 = vmatmul.f32.gmra.mxu0 %v595
          %v1929 = vpop.f32.mrf.mxu0
          %v1930 = vadd.f32 0.0, %v1929
          %1931 = vdwg.mxu0
          %1932 = vmatpush.xpose.msra.mxu0 %v1879
          %1933 = vmatpush.xpose.msra.mxu0 %v1877
          %1934 = vmatpush.xpose.msra.mxu0 %v1875
          %1935 = vmatpush.xpose.msra.mxu0 %v1873
          %1936 = vmatpush.xpose.msra.mxu0 %v1871
          %1937 = vmatpush.xpose.msra.mxu0 %v1869
          %1938 = vmatpush.xpose.msra.mxu0 %v1867
          %1939 = vmatpush.xpose.msra.mxu0 %v1865
          %1940 = vmatpush.xpose.msra.mxu0 %v1863
          %1941 = vmatpush.xpose.msra.mxu0 %v1861
          %1942 = vmatpush.xpose.msra.mxu0 %v1859
          %1943 = vmatpush.xpose.msra.mxu0 %v1857
          %1944 = vmatpush.xpose.msra.mxu0 %v1855
          %1945 = vmatpush.xpose.msra.mxu0 %v1853
          %1946 = vmatpush.xpose.msra.mxu0 %v1851
          %1947 = vmatpush.xpose.msra.mxu0 %v1849
          %1948 = vmatmul.f32.gmra.mxu0 %v596
          %v1949 = vpop.f32.mrf.mxu0
          %v1950 = vadd.f32 %v1930, %v1949
          %1951 = vdwg.mxu0
          %1952 = vmatpush.xpose.msra.mxu0 %v1910
          %1953 = vmatpush.xpose.msra.mxu0 %v1908
          %1954 = vmatpush.xpose.msra.mxu0 %v1906
          %1955 = vmatpush.xpose.msra.mxu0 %v1904
          %1956 = vmatpush.xpose.msra.mxu0 %v1902
          %1957 = vmatpush.xpose.msra.mxu0 %v1900
          %1958 = vmatpush.xpose.msra.mxu0 %v1898
          %1959 = vmatpush.xpose.msra.mxu0 %v1896
          %1960 = vmatpush.xpose.msra.mxu0 %v1894
          %1961 = vmatpush.xpose.msra.mxu0 %v1892
          %1962 = vmatpush.xpose.msra.mxu0 %v1890
          %1963 = vmatpush.xpose.msra.mxu0 %v1888
          %1964 = vmatpush.xpose.msra.mxu0 %v1886
          %1965 = vmatpush.xpose.msra.mxu0 %v1884
          %1966 = vmatpush.xpose.msra.mxu0 %v1882
          %1967 = vmatpush.xpose.msra.mxu0 %v1880
          %1968 = vmatmul.f32.gmra.mxu0 %v595
          %v1969 = vpop.f32.mrf.mxu0
          %v1970 = vadd.f32 0.0, %v1969
          %1971 = vdwg.mxu0
          %1972 = vmatpush.xpose.msra.mxu0 %v1911
          %1973 = vmatpush.xpose.msra.mxu0 %v1909
          %1974 = vmatpush.xpose.msra.mxu0 %v1907
          %1975 = vmatpush.xpose.msra.mxu0 %v1905
          %1976 = vmatpush.xpose.msra.mxu0 %v1903
          %1977 = vmatpush.xpose.msra.mxu0 %v1901
          %1978 = vmatpush.xpose.msra.mxu0 %v1899
          %1979 = vmatpush.xpose.msra.mxu0 %v1897
          %1980 = vmatpush.xpose.msra.mxu0 %v1895
          %1981 = vmatpush.xpose.msra.mxu0 %v1893
          %1982 = vmatpush.xpose.msra.mxu0 %v1891
          %1983 = vmatpush.xpose.msra.mxu0 %v1889
          %1984 = vmatpush.xpose.msra.mxu0 %v1887
          %1985 = vmatpush.xpose.msra.mxu0 %v1885
          %1986 = vmatpush.xpose.msra.mxu0 %v1883
          %1987 = vmatpush.xpose.msra.mxu0 %v1881
          %1988 = vmatmul.f32.gmra.mxu0 %v596
          %v1989 = vpop.f32.mrf.mxu0
          %v1990 = vadd.f32 %v1970, %v1989
          %1991 = vdwg.mxu0
          %s1992 = scalar_lea.vmem %s2, %s573
          %v1993 = vld [vmem:[%s1992] sm:$0xff]
          %v1994 = vld [vmem:[#allocation3] sm:$0xff]
          %v1995 = vld [vmem:[#allocation3 + $0x8] sm:$0xff]
          %v1996 = vld [vmem:[#allocation3 + $0x10] sm:$0xff]
          %v1997 = vld [vmem:[#allocation3 + $0x18] sm:$0xff]
          %v1998 = vld [vmem:[#allocation3 + $0x20] sm:$0xff]
          %v1999 = vld [vmem:[#allocation3 + $0x28] sm:$0xff]
          %v2000 = vld [vmem:[#allocation3 + $0x30] sm:$0xff]
          %v2001 = vld [vmem:[#allocation3 + $0x38] sm:$0xff]
          %2002 = vxpose.xlu0.b32.start [1/16] %v1993, 128
          %2003 = vxpose.xlu0.b32.cont [2/16] 0.0, 128
          %2004 = vxpose.xlu0.b32.cont [3/16] 0.0, 128
          %2005 = vxpose.xlu0.b32.cont [4/16] 0.0, 128
          %2006 = vxpose.xlu0.b32.cont [5/16] 0.0, 128
          %2007 = vxpose.xlu0.b32.cont [6/16] 0.0, 128
          %2008 = vxpose.xlu0.b32.cont [7/16] 0.0, 128
          %2009 = vxpose.xlu0.b32.cont [8/16] 0.0, 128
          %2010 = vxpose.xlu0.b32.cont [9/16] 0.0, 128
          %2011 = vxpose.xlu0.b32.cont [10/16] 0.0, 128
          %2012 = vxpose.xlu0.b32.cont [11/16] 0.0, 128
          %2013 = vxpose.xlu0.b32.cont [12/16] 0.0, 128
          %2014 = vxpose.xlu0.b32.cont [13/16] 0.0, 128
          %2015 = vxpose.xlu0.b32.cont [14/16] 0.0, 128
          %2016 = vxpose.xlu0.b32.cont [15/16] 0.0, 128
          %2017 = vxpose.xlu0.b32.end [16/16] 0.0, 128
          %v2018 = vpop.trf.xlu0
          %v2019 = vpop.trf.xlu0
          %v2020 = vpop.trf.xlu0
          %v2021 = vpop.trf.xlu0
          %v2022 = vpop.trf.xlu0
          %v2023 = vpop.trf.xlu0
          %v2024 = vpop.trf.xlu0
          %v2025 = vpop.trf.xlu0
          %v2026 = vpop.trf.xlu0
          %v2027 = vpop.trf.xlu0
          %v2028 = vpop.trf.xlu0
          %v2029 = vpop.trf.xlu0
          %v2030 = vpop.trf.xlu0
          %v2031 = vpop.trf.xlu0
          %v2032 = vpop.trf.xlu0
          %v2033 = vpop.trf.xlu0
          %v2035 = vsel %vm661, %v2018, 0
          %v2038 = vsel %vm661, %v2019, 0
          %v2041 = vsel %vm661, %v2020, 0
          %v2044 = vsel %vm661, %v2021, 0
          %2046 = vmatpush.msra.mxu0 0.0
          %2047 = vmatpush.msra.mxu0 0.0
          %2048 = vmatpush.msra.mxu0 0.0
          %2049 = vmatpush.msra.mxu0 0.0
          %2050 = vmatpush.msra.mxu0 0.0
          %2051 = vmatpush.msra.mxu0 0.0
          %2052 = vmatpush.msra.mxu0 0.0
          %2053 = vmatpush.msra.mxu0 0.0
          %2054 = vmatpush.msra.mxu0 0.0
          %2055 = vmatpush.msra.mxu0 0.0
          %2056 = vmatpush.msra.mxu0 0.0
          %2057 = vmatpush.msra.mxu0 0.0
          %2058 = vmatpush.msra.mxu0 0.0
          %2059 = vmatpush.msra.mxu0 0.0
          %2060 = vmatpush.msra.mxu0 0.0
          %2061 = vmatpush.msra.mxu0 %v1950
          %2062 = vmatmul.f32.gmra.mxu0 %v2035
          %v2063 = vpop.f32.mrf.mxu0
          %v2064 = vadd.f32 0.0, %v2063
          %2065 = vmatmul.f32.gmra.mxu0 %v2038
          %v2066 = vpop.f32.mrf.mxu0
          %v2067 = vadd.f32 0.0, %v2066
          %2068 = vmatmul.f32.gmra.mxu0 %v2041
          %v2069 = vpop.f32.mrf.mxu0
          %v2070 = vadd.f32 0.0, %v2069
          %2071 = vmatmul.f32.gmra.mxu0 %v2044
          %v2072 = vpop.f32.mrf.mxu0
          %v2073 = vadd.f32 0.0, %v2072
          %2074 = vdwg.mxu0
          %2075 = vmatpush.msra.mxu0 0.0
          %2076 = vmatpush.msra.mxu0 0.0
          %2077 = vmatpush.msra.mxu0 0.0
          %2078 = vmatpush.msra.mxu0 0.0
          %2079 = vmatpush.msra.mxu0 0.0
          %2080 = vmatpush.msra.mxu0 0.0
          %2081 = vmatpush.msra.mxu0 0.0
          %2082 = vmatpush.msra.mxu0 0.0
          %2083 = vmatpush.msra.mxu0 0.0
          %2084 = vmatpush.msra.mxu0 0.0
          %2085 = vmatpush.msra.mxu0 0.0
          %2086 = vmatpush.msra.mxu0 0.0
          %2087 = vmatpush.msra.mxu0 0.0
          %2088 = vmatpush.msra.mxu0 0.0
          %2089 = vmatpush.msra.mxu0 0.0
          %2090 = vmatpush.msra.mxu0 %v1990
          %2091 = vmatmul.f32.gmra.mxu0 %v2035
          %v2092 = vpop.f32.mrf.mxu0
          %v2093 = vadd.f32 0.0, %v2092
          %2094 = vmatmul.f32.gmra.mxu0 %v2038
          %v2095 = vpop.f32.mrf.mxu0
          %v2096 = vadd.f32 0.0, %v2095
          %2097 = vmatmul.f32.gmra.mxu0 %v2041
          %v2098 = vpop.f32.mrf.mxu0
          %v2099 = vadd.f32 0.0, %v2098
          %2100 = vmatmul.f32.gmra.mxu0 %v2044
          %v2101 = vpop.f32.mrf.mxu0
          %v2102 = vadd.f32 0.0, %v2101
          %2103 = vdwg.mxu0
          %v2104 = vadd.f32 %v1994, %v2064
          %v2105 = vadd.f32 %v1995, %v2093
          %v2106 = vadd.f32 %v1996, %v2067
          %v2107 = vadd.f32 %v1997, %v2096
          %v2108 = vadd.f32 %v1998, %v2070
          %v2109 = vadd.f32 %v1999, %v2099
          %v2110 = vadd.f32 %v2000, %v2073
          %v2111 = vadd.f32 %v2001, %v2102
          %2112 = vst [vmem:[#allocation3] sm:$0xff] %v2104
          %2113 = vst [vmem:[#allocation3 + $0x8] sm:$0xff] %v2105
          %2114 = vst [vmem:[#allocation3 + $0x10] sm:$0xff] %v2106
          %2115 = vst [vmem:[#allocation3 + $0x18] sm:$0xff] %v2107
          %2116 = vst [vmem:[#allocation3 + $0x20] sm:$0xff] %v2108
          %2117 = vst [vmem:[#allocation3 + $0x28] sm:$0xff] %v2109
          %2118 = vst [vmem:[#allocation3 + $0x30] sm:$0xff] %v2110
          %2119 = vst [vmem:[#allocation3 + $0x38] sm:$0xff] %v2111
        $region41: #{tpu_custom_call.1} parent=35 // loop_footer
          %s572 = sadd.s32 1, %s568
        $region42: #{tpu_custom_call.1} parent=35 // loop_footer_branch
          %567 = sbr.rel target = $region38
        $region43: #{tpu_custom_call.1} parent=35 // loop_exit
          _
        %v2120 = vld [vmem:[#allocation3] sm:$0xff]
        %v2121 = vld [vmem:[#allocation3 + $0x8] sm:$0xff]
        %v2122 = vld [vmem:[#allocation3 + $0x10] sm:$0xff]
        %v2123 = vld [vmem:[#allocation3 + $0x18] sm:$0xff]
        %v2124 = vld [vmem:[#allocation3 + $0x20] sm:$0xff]
        %v2125 = vld [vmem:[#allocation3 + $0x28] sm:$0xff]
        %v2126 = vld [vmem:[#allocation3 + $0x30] sm:$0xff]
        %v2127 = vld [vmem:[#allocation3 + $0x38] sm:$0xff]
        %v2128 = vadd.f32 %v2120, %v2122
        %v2129 = vadd.f32 %v2128, %v2124
        %v2130 = vadd.f32 %v2129, %v2126
        %v2131 = vrot.slane %v2130, 4
        %v2132 = vadd.f32 %v2130, %v2131
        %v2133 = vrot.slane %v2132, 2
        %v2134 = vadd.f32 %v2132, %v2133
        %v2135 = vrot.slane %v2134, 1
        %v2136 = vadd.f32 %v2134, %v2135
        %v2137 = vadd.f32 %v2121, %v2123
        %v2138 = vadd.f32 %v2137, %v2125
        %v2139 = vadd.f32 %v2138, %v2127
        %v2140 = vrot.slane %v2139, 4
        %v2141 = vadd.f32 %v2139, %v2140
        %v2142 = vrot.slane %v2141, 2
        %v2143 = vadd.f32 %v2141, %v2142
        %v2144 = vrot.slane %v2143, 1
        %v2145 = vadd.f32 %v2143, %v2144
        %v2146 = vrcp.pop 32.0
        %v2147 = vmul.f32 32.0, %v2146
        %v2148 = vsub.f32 1.0, %v2147
        %v2149 = vmul.f32 %v2146, %v2148
        %v2150 = vadd.f32 %v2146, %v2149
        %vm2151 = vweird.f32 %v2146
        %v2152 = vsel %vm2151, %v2146, %v2150
        %v2153 = vmul.f32 %v2136, %v2152
        %v2154 = vmul.f32 %v2145, %v2152
        %v2155 = vsub.f32 %v2120, %v2153
        %v2156 = vsub.f32 %v2121, %v2154
        %v2157 = vsub.f32 %v2122, %v2153
        %v2158 = vsub.f32 %v2123, %v2154
        %v2159 = vsub.f32 %v2124, %v2153
        %v2160 = vsub.f32 %v2125, %v2154
        %v2161 = vsub.f32 %v2126, %v2153
        %v2162 = vsub.f32 %v2127, %v2154
        %v2163 = vmul.f32 %v2155, %v2155
        %v2164 = vmul.f32 %v2156, %v2156
        %v2165 = vmul.f32 %v2157, %v2157
        %v2166 = vmul.f32 %v2158, %v2158
        %v2167 = vmul.f32 %v2159, %v2159
        %v2168 = vmul.f32 %v2160, %v2160
        %v2169 = vmul.f32 %v2161, %v2161
        %v2170 = vmul.f32 %v2162, %v2162
        %v2171 = vadd.f32 %v2163, %v2165
        %v2172 = vadd.f32 %v2171, %v2167
        %v2173 = vadd.f32 %v2172, %v2169
        %v2174 = vrot.slane %v2173, 4
        %v2175 = vadd.f32 %v2173, %v2174
        %v2176 = vrot.slane %v2175, 2
        %v2177 = vadd.f32 %v2175, %v2176
        %v2178 = vrot.slane %v2177, 1
        %v2179 = vadd.f32 %v2177, %v2178
        %v2180 = vadd.f32 %v2164, %v2166
        %v2181 = vadd.f32 %v2180, %v2168
        %v2182 = vadd.f32 %v2181, %v2170
        %v2183 = vrot.slane %v2182, 4
        %v2184 = vadd.f32 %v2182, %v2183
        %v2185 = vrot.slane %v2184, 2
        %v2186 = vadd.f32 %v2184, %v2185
        %v2187 = vrot.slane %v2186, 1
        %v2188 = vadd.f32 %v2186, %v2187
        %v2189 = vmul.f32 %v2179, %v2152
        %v2190 = vmul.f32 %v2188, %v2152
        %v2191 = vadd.f32 %v2189, 1e-05
        %v2192 = vadd.f32 %v2190, 1e-05
        %v2193 = vrsqrt.pop %v2191
        %v2194 = vmul.f32 %v2193, %v2191
        %v2195 = vmul.f32 %v2194, %v2193
        %v2196 = vmul.f32 0.5, %v2195
        %v2197 = vsub.f32 1.5, %v2196
        %v2198 = vmul.f32 %v2193, %v2197
        %vm2199 = vweird.f32 %v2191
        %vm2200 = vweird.f32 %v2193
        %vm2201 = vmor %vm2199, %vm2200
        %v2202 = vsel %vm2201, %v2193, %v2198
        %v2203 = vrsqrt.pop %v2192
        %v2204 = vmul.f32 %v2203, %v2192
        %v2205 = vmul.f32 %v2204, %v2203
        %v2206 = vmul.f32 0.5, %v2205
        %v2207 = vsub.f32 1.5, %v2206
        %v2208 = vmul.f32 %v2203, %v2207
        %vm2209 = vweird.f32 %v2192
        %vm2210 = vweird.f32 %v2203
        %vm2211 = vmor %vm2209, %vm2210
        %v2212 = vsel %vm2211, %v2203, %v2208
        %v2213 = vmul.f32 %v2155, %v2202
        %v2214 = vmul.f32 %v2156, %v2212
        %v2215 = vmul.f32 %v2157, %v2202
        %v2216 = vmul.f32 %v2158, %v2212
        %v2217 = vmul.f32 %v2159, %v2202
        %v2218 = vmul.f32 %v2160, %v2212
        %v2219 = vmul.f32 %v2161, %v2202
        %v2220 = vmul.f32 %v2162, %v2212
        %s2221 = scalar_lea.vmem %s3, 32
        %v2222 = vld [vmem:[%s2221] sm:$0xff]
        %v2223 = vld [vmem:[%s2221 + $0x8] sm:$0xff]
        %v2224 = vld [vmem:[%s2221 + $0x10] sm:$0xff]
        %v2225 = vld [vmem:[%s2221 + $0x18] sm:$0xff]
        %2227 = vset.pattern.permute.xlu0 0
        %2228 = vperm.xlu0 %2227, %v2222
        %v2229 = vpop.permute.xlu0 %2228
        %2232 = vset.pattern.permute.xlu0 0
        %2233 = vperm.xlu0 %2232, %v2223
        %v2234 = vpop.permute.xlu0 %2233
        %2237 = vset.pattern.permute.xlu0 0
        %2238 = vperm.xlu0 %2237, %v2224
        %v2239 = vpop.permute.xlu0 %2238
        %2242 = vset.pattern.permute.xlu0 0
        %2243 = vperm.xlu0 %2242, %v2225
        %v2244 = vpop.permute.xlu0 %2243
        %v2246 = vmul.f32 %v2213, %v2229
        %v2247 = vmul.f32 %v2214, %v2229
        %v2248 = vmul.f32 %v2215, %v2234
        %v2249 = vmul.f32 %v2216, %v2234
        %v2250 = vmul.f32 %v2217, %v2239
        %v2251 = vmul.f32 %v2218, %v2239
        %v2252 = vmul.f32 %v2219, %v2244
        %v2253 = vmul.f32 %v2220, %v2244
        %s2254 = scalar_lea.vmem %s3, 64
        %v2255 = vld [vmem:[%s2254] sm:$0xff]
        %v2256 = vld [vmem:[%s2254 + $0x8] sm:$0xff]
        %v2257 = vld [vmem:[%s2254 + $0x10] sm:$0xff]
        %v2258 = vld [vmem:[%s2254 + $0x18] sm:$0xff]
        %2260 = vset.pattern.permute.xlu0 0
        %2261 = vperm.xlu0 %2260, %v2255
        %v2262 = vpop.permute.xlu0 %2261
        %2265 = vset.pattern.permute.xlu0 0
        %2266 = vperm.xlu0 %2265, %v2256
        %v2267 = vpop.permute.xlu0 %2266
        %2270 = vset.pattern.permute.xlu0 0
        %2271 = vperm.xlu0 %2270, %v2257
        %v2272 = vpop.permute.xlu0 %2271
        %2275 = vset.pattern.permute.xlu0 0
        %2276 = vperm.xlu0 %2275, %v2258
        %v2277 = vpop.permute.xlu0 %2276
        %v2279 = vadd.f32 %v2246, %v2262
        %v2280 = vadd.f32 %v2247, %v2262
        %v2281 = vadd.f32 %v2248, %v2267
        %v2282 = vadd.f32 %v2249, %v2267
        %v2283 = vadd.f32 %v2250, %v2272
        %v2284 = vadd.f32 %v2251, %v2272
        %v2285 = vadd.f32 %v2252, %v2277
        %v2286 = vadd.f32 %v2253, %v2277
        %2287 = vst [vmem:[%s190] sm:$0xff] %v2279
        %2288 = vst [vmem:[%s190 + $0x8] sm:$0xff] %v2280
        %2289 = vst [vmem:[%s190 + $0x10] sm:$0xff] %v2281
        %2290 = vst [vmem:[%s190 + $0x18] sm:$0xff] %v2282
        %2291 = vst [vmem:[%s190 + $0x20] sm:$0xff] %v2283
        %2292 = vst [vmem:[%s190 + $0x28] sm:$0xff] %v2284
        %2293 = vst [vmem:[%s190 + $0x30] sm:$0xff] %v2285
        %2294 = vst [vmem:[%s190 + $0x38] sm:$0xff] %v2286
        %s2295 = sand.u32 %s115, 1
        %s2296 = scalar_lea.sflag [#allocation5], %s2295
        %s2297 = sand.u32 %s115, 1
        %s2298 = smul.addr %s2297, 64
        %s2299 = scalar_lea.vmem [#allocation4], %s2298
        // Predicated region
        $region44: #{tpu_custom_call.1} parent=35 // pred_check
          %p2300 = pneg %p125
        $region45: #{tpu_custom_call.1} parent=35 // pred_check_branch
          %2302 = sbr.rel (%p2300) target = $region47
        $region46: #{tpu_custom_call.1} parent=35 // pred_region
          %2304 = vsyncadd %s2296, 0
          %s2305 = smul.addr %s18, 8
          %s2306 = smul.addr %s2305, 8
          %s2307 = scalar_lea.hbm %s4, %s2306
          %s2308 = sshll.u32 %s2299, 4
          %s2309 = int_to_ptr.vmem [resolvable:$true] %s2308
          %s2310 = sshll.u32 %s2307, 4
          %s2311 = int_to_ptr.hbm [resolvable:$true] %s2310
          %2316 = dma.vmem_to_hbm [thread:$0]  %s2309, 1024, %s2311, %s2296, 256, 256, 16
        $region47: #{tpu_custom_call.1} parent=35 // pred_fallthru
          _
      $region36: #{tpu_custom_call.1} parent=5 // pred_fallthru
        _
      %p2317 = scmp.le.s32.totalorder 2, %s13
      // Predicated region
      $region48: #{tpu_custom_call.1} parent=5 // pred_check
        %p2318 = pneg %p2317
      $region49: #{tpu_custom_call.1} parent=5 // pred_check_branch
        %2320 = sbr.rel (%p2318) target = $region51
      $region50: #{tpu_custom_call.1} parent=5 // pred_region
        %s2321 = ssub.s32 %s13, 2
        // Predicated region
        $region52: #{tpu_custom_call.1} parent=50 // pred_check
          %p2322 = pneg %p131
        $region53: #{tpu_custom_call.1} parent=50 // pred_check_branch
          %2324 = sbr.rel (%p2322) target = $region55
        $region54: #{tpu_custom_call.1} parent=50 // pred_region
          %s2325 = sand.u32 %s116, 1
          %s2326 = scalar_lea.sflag [#allocation5], %s2325
          %s2327 = sand.u32 %s116, 1
          %s2328 = smul.addr %s2327, 64
          %s2329 = scalar_lea.vmem [#allocation4], %s2328
          %2331 = dma.done %s2326, 1024
        $region55: #{tpu_custom_call.1} parent=50 // pred_fallthru
          _
      $region51: #{tpu_custom_call.1} parent=5 // pred_fallthru
        _
    $region6: #{tpu_custom_call.1} parent=1 // loop_footer
      %s17 = sadd.s32 1, %s13
    $region7: #{tpu_custom_call.1} parent=1 // loop_footer_branch
      %12 = sbr.rel target = $region3
    $region8: #{tpu_custom_call.1} parent=1 // loop_exit
      _
    %2332 = vsyncpa [#allocation5], 1
    %s2333 = scalar_lea.sflag [#allocation5], 1
    %2334 = vsyncpa %s2333, 1

</llo_original>
